<compile_context>
chip_gen: v7x
topology: tpu7x:2x2x1
jax: 0.10.0
libtpu: 0.0.40
codegen_flags: <defaults>
</compile_context>

<pallas_src>
import functools
import math

import jax
import jax.numpy as jnp
from jax import lax
from jax.experimental import pallas as pl
from jax.experimental.pallas import tpu as pltpu


# ------------------------------------------------------------- fused kernel
def _fused_attn_kernel(idx_ref, x_ref, wq_ref, bq_ref, wkv_ref, bkv_ref,
                       o_ref, xq_scr, ctx_scr, *, num_heads, head_dim,
                       mxu_dtype):
    """One grid step = one batch element; all intermediates stay on-chip.

    idx_ref : SMEM (Sq,) int32   pruned patch indices (scalar prefetch)
    x_ref   : (S,  D)            full input rows (q rows gathered from here)
    wq_ref  : (D,  D), bq_ref : (1, D)     (scale already folded in at prep)
    wkv_ref : (D, 2D), bkv_ref: (1, 2D)    (Wk | Wv fused at prep)
    o_ref   : (Sq, D)            context in final (Sq, H*Dh) layout
    xq_scr  : VMEM (Sq, D) input-dtype scratch (gathered query rows)
    ctx_scr : VMEM (Sq, D) f32 scratch (per-head context accumulator)
    """
    D = num_heads * head_dim
    Sq = xq_scr.shape[0]

    def to_mxu(t):
        return t if mxu_dtype is None else t.astype(mxu_dtype)

    # ---- in-kernel row gather of the pruned query rows (prune commutes with
    # the row-wise Linear, so computing q from the pruned rows is exact).
    def _gather(i, carry):
        xq_scr[pl.ds(i, 1), :] = x_ref[pl.ds(idx_ref[i], 1), :]
        return carry
    lax.fori_loop(0, Sq, _gather, 0, unroll=True)

    # ---- fused projections (casts hoisted: x / xq cast once, weights arrive
    # already in mxu dtype from prepare_params).
    x_m = to_mxu(x_ref[...])          # (S,  D)
    xq_m = to_mxu(xq_scr[...])        # (Sq, D)
    q = jnp.dot(xq_m, wq_ref[...],
                preferred_element_type=jnp.float32) + bq_ref[...]     # (Sq, D)
    kv = jnp.dot(x_m, wkv_ref[...],
                 preferred_element_type=jnp.float32) + bkv_ref[...]   # (S, 2D)

    # Hoisted casts for the attention matmuls (done once, not per head).
    q_m = to_mxu(q)
    kv_m = to_mxu(kv)
    k = kv_m[:, :D]                   # (S, D)
    v = kv_m[:, D:]                   # (S, D)

    # ---- per-head attention; each head writes its (Sq, Dh) context slice
    # straight into the VMEM scratch (no live ctx_parts list / concatenate).
    for h in range(num_heads):
        lo = h * head_dim
        hi = lo + head_dim
        qh = q_m[:, lo:hi]            # (Sq, Dh)
        kh = k[:, lo:hi]              # (S,  Dh)
        vh = v[:, lo:hi]              # (S,  Dh)

        # Contract last dims directly: MXU consumes K untransposed.
        s = lax.dot_general(qh, kh, (((1,), (1,)), ((), ())),
                            preferred_element_type=jnp.float32)       # (Sq, S)
        m = jnp.max(s, axis=-1, keepdims=True)
        p = jnp.exp(s - m)
        l = jnp.sum(p, axis=-1, keepdims=True)
        # One exact reciprocal per row (EUP, hidden under MXU) + multiply.
        p = p * pl.reciprocal(l, approx=False)
        ctx_scr[:, lo:hi] = jnp.dot(to_mxu(p), vh,
                                    preferred_element_type=jnp.float32)

    # Single lane-dense full-width store in the final output layout.
    o_ref[...] = ctx_scr[...].astype(o_ref.dtype)


# --------------------------------------------------------- parameter prep
def prepare_params(raw_params, head_dim, mxu_dtype=None):
    """One-time prep: fold 1/sqrt(Dh) into the query projection, fuse [Wk|Wv],
    and optionally pre-cast weights to the MXU dtype (biases stay f32 — they
    are added to the f32 accumulator)."""
    scale = 1.0 / math.sqrt(head_dim)
    wq = raw_params["wq_t"] * scale
    bq = raw_params["bq"] * scale
    wkv = jnp.concatenate([raw_params["wk_t"], raw_params["wv_t"]], axis=1)
    bkv = jnp.concatenate([raw_params["bk"], raw_params["bv"]], axis=1)
    if mxu_dtype is not None:
        wq = wq.astype(mxu_dtype)
        wkv = wkv.astype(mxu_dtype)
    return {"wq": wq, "bq": bq.astype(jnp.float32),
            "wkv": wkv, "bkv": bkv.astype(jnp.float32)}


# ----------------------------------------------------------------- wrapper
def modified_vit_self_attention(hidden_states, prepared_params,
                                patch_indices_to_keep, num_heads, head_dim,
                                mxu_dtype=None, vmem_limit_bytes=None,
                                single_buffer_weights=False):
    """hidden_states: (B, S, D); prepared_params from prepare_params().
    Returns (B, Sq, D) context (same semantics as the PyTorch module)."""
    B, S, D = hidden_states.shape
    assert num_heads * head_dim == D
    Sq = int(patch_indices_to_keep.shape[0])
    idx = patch_indices_to_keep.astype(jnp.int32)

    kernel = functools.partial(
        _fused_attn_kernel, num_heads=num_heads, head_dim=head_dim,
        mxu_dtype=mxu_dtype)

    def w_spec(shape):
        # Grid-invariant weights/biases: optionally single-buffer them (v7x
        # VMEM budget) — double-buffering a constant block is pure waste.
        zero_map = lambda b, idx_ref: (0,) * len(shape)
        if single_buffer_weights:
            return pl.BlockSpec(shape, zero_map, pipeline_mode=pl.Buffered(1))
        return pl.BlockSpec(shape, zero_map)

    grid_spec = pltpu.PrefetchScalarGridSpec(
        num_scalar_prefetch=1,                      # patch indices -> SMEM
        grid=(B,),
        in_specs=[
            pl.BlockSpec((None, S, D), lambda b, idx_ref: (b, 0, 0)),  # x
            w_spec((D, D)),                                            # Wq
            w_spec((1, D)),                                            # bq
            w_spec((D, 2 * D)),                                        # Wkv
            w_spec((1, 2 * D)),                                        # bkv
        ],
        out_specs=pl.BlockSpec((None, Sq, D), lambda b, idx_ref: (b, 0, 0)),
        scratch_shapes=[
            pltpu.VMEM((Sq, D), hidden_states.dtype),   # gathered query rows
            pltpu.VMEM((Sq, D), jnp.float32),           # context accumulator
        ],
    )

    return pl.pallas_call(
        kernel,
        out_shape=jax.ShapeDtypeStruct((B, Sq, D), hidden_states.dtype),
        grid_spec=grid_spec,
        compiler_params=pltpu.CompilerParams(
            dimension_semantics=("parallel",),
            vmem_limit_bytes=vmem_limit_bytes),
    )(idx, hidden_states, prepared_params["wq"], prepared_params["bq"],
      prepared_params["wkv"], prepared_params["bkv"])


# ------------------------------------------------------- pure-JAX reference
def reference(hidden_states, raw_params, patch_indices_to_keep,
              num_heads, head_dim):
    B, S, D = hidden_states.shape

    def lin(w_t, b):
        return hidden_states @ w_t + b[0]

    def to_heads(t):
        return t.reshape(B, S, num_heads, head_dim).transpose(0, 2, 1, 3)

    q = to_heads(lin(raw_params["wq_t"], raw_params["bq"]))
    k = to_heads(lin(raw_params["wk_t"], raw_params["bk"]))
    v = to_heads(lin(raw_params["wv_t"], raw_params["bv"]))
    q = q[:, :, patch_indices_to_keep, :]
    s = jnp.einsum("bhqd,bhkd->bhqk", q, k) / math.sqrt(head_dim)
    p = jax.nn.softmax(s, axis=-1)
    ctx = jnp.einsum("bhqk,bhkd->bhqd", p, v)
    Sq = ctx.shape[2]
    return ctx.transpose(0, 2, 1, 3).reshape(B, Sq, num_heads * head_dim)


if __name__ == "__main__":
    # Small ViT-like config: hidden=32, heads=4 (head_dim=8), seq=8, batch=2.
    B, S, D = 2, 8, 32
    num_heads, head_dim = 4, 8
    assert num_heads * head_dim == D

    key = jax.random.PRNGKey(0)
    kx, kq, kk, kv, kbq, kbk, kbv = jax.random.split(key, 7)

    hidden_states = jax.random.normal(kx, (B, S, D), dtype=jnp.float32)

    # nn.Linear(D, D) weights are (out, in) in PyTorch; store transposed (in, out).
    raw_params = {
        "wq_t": 0.1 * jax.random.normal(kq, (D, D), dtype=jnp.float32),
        "wk_t": 0.1 * jax.random.normal(kk, (D, D), dtype=jnp.float32),
        "wv_t": 0.1 * jax.random.normal(kv, (D, D), dtype=jnp.float32),
        "bq": 0.01 * jax.random.normal(kbq, (1, D), dtype=jnp.float32),
        "bk": 0.01 * jax.random.normal(kbk, (1, D), dtype=jnp.float32),
        "bv": 0.01 * jax.random.normal(kbv, (1, D), dtype=jnp.float32),
    }

    # One-time parameter prep (scale folding + Wk|Wv fusion). bf16 weights /
    # mxu_dtype=jnp.bfloat16 would be used here for v6e/v7x production shapes.
    prepared = prepare_params(raw_params, head_dim, mxu_dtype=None)

    # Keep 5 of the 8 patches (static prune indices).
    patch_indices_to_keep = jnp.array([0, 2, 3, 5, 7], dtype=jnp.int32)

    out = modified_vit_self_attention(hidden_states, prepared,
                                      patch_indices_to_keep, num_heads,
                                      head_dim)
    out = jax.block_until_ready(out)

    ref = reference(hidden_states, raw_params, patch_indices_to_keep,
                    num_heads, head_dim)
    assert out.shape == (B, patch_indices_to_keep.shape[0], D)
    # Exact reciprocal in the softmax normalize -> f32-tight agreement.
    assert jnp.allclose(out, ref, atol=2e-4, rtol=2e-4)

    print("KERNEL_OK")
</pallas_src>

<mosaic_0001>
module attributes {stable_mosaic.version = 11 : i64} {
  func.func @_fused_attn_kernel(%arg0: i32, %arg1: memref<5xi32, #tpu.memory_space<smem>>, %arg2: memref<1x8x32xf32, #tpu.memory_space<vmem>>, %arg3: memref<32x32xf32, #tpu.memory_space<vmem>>, %arg4: memref<1x32xf32, #tpu.memory_space<vmem>>, %arg5: memref<32x64xf32, #tpu.memory_space<vmem>>, %arg6: memref<1x64xf32, #tpu.memory_space<vmem>>, %arg7: memref<1x5x32xf32, #tpu.memory_space<vmem>>, %arg8: memref<5x32xf32, #tpu.memory_space<vmem>>, %arg9: memref<5x32xf32, #tpu.memory_space<vmem>>) attributes {dimension_semantics = [#tpu.dimension_semantics<parallel>], iteration_bounds = array<i64: 2>, scalar_prefetch = 1 : i64, scratch_operands = 2 : i64, tpu.core_type = #tpu.core_type<tc>, window_params = [{transform_indices = @transform_0, window_bounds = array<i64: 1, 8, 32>}, {pipeline_mode = #tpu.pipeline_mode<synchronous>, transform_indices = @transform_1, window_bounds = array<i64: 32, 32>}, {pipeline_mode = #tpu.pipeline_mode<synchronous>, transform_indices = @transform_2, window_bounds = array<i64: 1, 32>}, {pipeline_mode = #tpu.pipeline_mode<synchronous>, transform_indices = @transform_3, window_bounds = array<i64: 32, 64>}, {pipeline_mode = #tpu.pipeline_mode<synchronous>, transform_indices = @transform_4, window_bounds = array<i64: 1, 64>}, {transform_indices = @transform_5, window_bounds = array<i64: 1, 5, 32>}]} {
    %c0_i32 = arith.constant 0 : i32
    %0 = arith.index_cast %c0_i32 : i32 to index
    %1 = memref.load %arg1[%0] : memref<5xi32, #tpu.memory_space<smem>>
    %c0 = arith.constant 0 : index
    %2 = arith.index_cast %1 : i32 to index
    %c0_0 = arith.constant 0 : index
    %3 = vector.load %arg2[%c0, %2, %c0_0] : memref<1x8x32xf32, #tpu.memory_space<vmem>>, vector<1x1x32xf32>
    %4 = vector.shape_cast %3 : vector<1x1x32xf32> to vector<1x32xf32>
    %5 = arith.index_cast %c0_i32 : i32 to index
    %c0_1 = arith.constant 0 : index
    %6 = vector.load %arg8[%5, %c0_1] : memref<5x32xf32, #tpu.memory_space<vmem>>, vector<1x32xf32>
    tpu.vector_store %arg8[%5, %c0_1], %4 {strides = array<i32>} : memref<5x32xf32, #tpu.memory_space<vmem>>, vector<1x32xf32>,
    %c1_i32 = arith.constant 1 : i32
    %7 = arith.index_cast %c1_i32 : i32 to index
    %8 = memref.load %arg1[%7] : memref<5xi32, #tpu.memory_space<smem>>
    %c0_2 = arith.constant 0 : index
    %9 = arith.index_cast %8 : i32 to index
    %c0_3 = arith.constant 0 : index
    %10 = vector.load %arg2[%c0_2, %9, %c0_3] : memref<1x8x32xf32, #tpu.memory_space<vmem>>, vector<1x1x32xf32>
    %11 = vector.shape_cast %10 : vector<1x1x32xf32> to vector<1x32xf32>
    %12 = arith.index_cast %c1_i32 : i32 to index
    %c0_4 = arith.constant 0 : index
    %13 = vector.load %arg8[%12, %c0_4] : memref<5x32xf32, #tpu.memory_space<vmem>>, vector<1x32xf32>
    tpu.vector_store %arg8[%12, %c0_4], %11 {strides = array<i32>} : memref<5x32xf32, #tpu.memory_space<vmem>>, vector<1x32xf32>,
    %c2_i32 = arith.constant 2 : i32
    %14 = arith.index_cast %c2_i32 : i32 to index
    %15 = memref.load %arg1[%14] : memref<5xi32, #tpu.memory_space<smem>>
    %c0_5 = arith.constant 0 : index
    %16 = arith.index_cast %15 : i32 to index
    %c0_6 = arith.constant 0 : index
    %17 = vector.load %arg2[%c0_5, %16, %c0_6] : memref<1x8x32xf32, #tpu.memory_space<vmem>>, vector<1x1x32xf32>
    %18 = vector.shape_cast %17 : vector<1x1x32xf32> to vector<1x32xf32>
    %19 = arith.index_cast %c2_i32 : i32 to index
    %c0_7 = arith.constant 0 : index
    %20 = vector.load %arg8[%19, %c0_7] : memref<5x32xf32, #tpu.memory_space<vmem>>, vector<1x32xf32>
    tpu.vector_store %arg8[%19, %c0_7], %18 {strides = array<i32>} : memref<5x32xf32, #tpu.memory_space<vmem>>, vector<1x32xf32>,
    %c3_i32 = arith.constant 3 : i32
    %21 = arith.index_cast %c3_i32 : i32 to index
    %22 = memref.load %arg1[%21] : memref<5xi32, #tpu.memory_space<smem>>
    %c0_8 = arith.constant 0 : index
    %23 = arith.index_cast %22 : i32 to index
    %c0_9 = arith.constant 0 : index
    %24 = vector.load %arg2[%c0_8, %23, %c0_9] : memref<1x8x32xf32, #tpu.memory_space<vmem>>, vector<1x1x32xf32>
    %25 = vector.shape_cast %24 : vector<1x1x32xf32> to vector<1x32xf32>
    %26 = arith.index_cast %c3_i32 : i32 to index
    %c0_10 = arith.constant 0 : index
    %27 = vector.load %arg8[%26, %c0_10] : memref<5x32xf32, #tpu.memory_space<vmem>>, vector<1x32xf32>
    tpu.vector_store %arg8[%26, %c0_10], %25 {strides = array<i32>} : memref<5x32xf32, #tpu.memory_space<vmem>>, vector<1x32xf32>,
    %c4_i32 = arith.constant 4 : i32
    %28 = arith.index_cast %c4_i32 : i32 to index
    %29 = memref.load %arg1[%28] : memref<5xi32, #tpu.memory_space<smem>>
    %c0_11 = arith.constant 0 : index
    %30 = arith.index_cast %29 : i32 to index
    %c0_12 = arith.constant 0 : index
    %31 = vector.load %arg2[%c0_11, %30, %c0_12] : memref<1x8x32xf32, #tpu.memory_space<vmem>>, vector<1x1x32xf32>
    %32 = vector.shape_cast %31 : vector<1x1x32xf32> to vector<1x32xf32>
    %33 = arith.index_cast %c4_i32 : i32 to index
    %c0_13 = arith.constant 0 : index
    %34 = vector.load %arg8[%33, %c0_13] : memref<5x32xf32, #tpu.memory_space<vmem>>, vector<1x32xf32>
    tpu.vector_store %arg8[%33, %c0_13], %32 {strides = array<i32>} : memref<5x32xf32, #tpu.memory_space<vmem>>, vector<1x32xf32>,
    %c5_i32 = arith.constant 5 : i32
    %c0_14 = arith.constant 0 : index
    %c0_15 = arith.constant 0 : index
    %c0_16 = arith.constant 0 : index
    %35 = vector.load %arg2[%c0_14, %c0_15, %c0_16] : memref<1x8x32xf32, #tpu.memory_space<vmem>>, vector<1x8x32xf32>
    %36 = vector.shape_cast %35 : vector<1x8x32xf32> to vector<8x32xf32>
    %c0_17 = arith.constant 0 : index
    %c0_18 = arith.constant 0 : index
    %37 = vector.load %arg8[%c0_17, %c0_18] : memref<5x32xf32, #tpu.memory_space<vmem>>, vector<5x32xf32>
    %c0_19 = arith.constant 0 : index
    %c0_20 = arith.constant 0 : index
    %38 = vector.load %arg3[%c0_19, %c0_20] : memref<32x32xf32, #tpu.memory_space<vmem>>, vector<32x32xf32>
    %cst = arith.constant dense<0.000000e+00> : vector<5x32xf32>
    %39 = tpu.matmul %37, %38, %cst {dimension_numbers = #tpu.dot_dimension_numbers<[1], [0], [0], [1], [0, 0, 1, 1], [], []>} : vector<5x32xf32>, vector<32x32xf32>, vector<5x32xf32> -> vector<5x32xf32>
    %c0_21 = arith.constant 0 : index
    %c0_22 = arith.constant 0 : index
    %40 = vector.load %arg4[%c0_21, %c0_22] : memref<1x32xf32, #tpu.memory_space<vmem>>, vector<1x32xf32>
    %41 = vector.broadcast %40 : vector<1x32xf32> to vector<5x32xf32>
    %42 = arith.addf %39, %41 : vector<5x32xf32>
    %c0_23 = arith.constant 0 : index
    %c0_24 = arith.constant 0 : index
    %43 = vector.load %arg5[%c0_23, %c0_24] : memref<32x64xf32, #tpu.memory_space<vmem>>, vector<32x64xf32>
    %cst_25 = arith.constant dense<0.000000e+00> : vector<8x64xf32>
    %44 = tpu.matmul %36, %43, %cst_25 {dimension_numbers = #tpu.dot_dimension_numbers<[1], [0], [0], [1], [0, 0, 1, 1], [], []>} : vector<8x32xf32>, vector<32x64xf32>, vector<8x64xf32> -> vector<8x64xf32>
    %c0_26 = arith.constant 0 : index
    %c0_27 = arith.constant 0 : index
    %45 = vector.load %arg6[%c0_26, %c0_27] : memref<1x64xf32, #tpu.memory_space<vmem>>, vector<1x64xf32>
    %46 = vector.broadcast %45 : vector<1x64xf32> to vector<8x64xf32>
    %47 = arith.addf %44, %46 : vector<8x64xf32>
    %48 = vector.extract_strided_slice %47 {offsets = [0, 0], sizes = [8, 32], strides = [1, 1]} : vector<8x64xf32> to vector<8x32xf32>
    %49 = vector.extract_strided_slice %47 {offsets = [0, 32], sizes = [8, 32], strides = [1, 1]} : vector<8x64xf32> to vector<8x32xf32>
    %50 = vector.extract_strided_slice %42 {offsets = [0, 0], sizes = [5, 8], strides = [1, 1]} : vector<5x32xf32> to vector<5x8xf32>
    %51 = vector.extract_strided_slice %48 {offsets = [0, 0], sizes = [8, 8], strides = [1, 1]} : vector<8x32xf32> to vector<8x8xf32>
    %52 = vector.extract_strided_slice %49 {offsets = [0, 0], sizes = [8, 8], strides = [1, 1]} : vector<8x32xf32> to vector<8x8xf32>
    %cst_28 = arith.constant dense<0.000000e+00> : vector<5x8xf32>
    %53 = tpu.matmul %50, %51, %cst_28 {dimension_numbers = #tpu.dot_dimension_numbers<[1], [1], [0], [0], [0, 0, 1, 0], [], []>} : vector<5x8xf32>, vector<8x8xf32>, vector<5x8xf32> -> vector<5x8xf32>
    %cst_29 = arith.constant dense<0xFF800000> : vector<5xf32>
    %54 = vector.multi_reduction <maximumf>, %53, %cst_29 [1] : vector<5x8xf32> to vector<5xf32>
    %55 = vector.shape_cast %54 : vector<5xf32> to vector<5x1xf32>
    %56 = vector.broadcast %55 : vector<5x1xf32> to vector<5x8xf32>
    %57 = arith.subf %53, %56 : vector<5x8xf32>
    %58 = math.exp %57 : vector<5x8xf32>
    %cst_30 = arith.constant dense<0.000000e+00> : vector<5xf32>
    %59 = vector.multi_reduction <add>, %58, %cst_30 [1] : vector<5x8xf32> to vector<5xf32>
    %60 = vector.shape_cast %59 : vector<5xf32> to vector<5x1xf32>
    %61 = tpu.reciprocal %60 : vector<5x1xf32> -> vector<5x1xf32>
    %62 = vector.broadcast %61 : vector<5x1xf32> to vector<5x8xf32>
    %63 = arith.mulf %58, %62 : vector<5x8xf32>
    %cst_31 = arith.constant dense<0.000000e+00> : vector<5x8xf32>
    %64 = tpu.matmul %63, %52, %cst_31 {dimension_numbers = #tpu.dot_dimension_numbers<[1], [0], [0], [1], [0, 0, 1, 1], [], []>} : vector<5x8xf32>, vector<8x8xf32>, vector<5x8xf32> -> vector<5x8xf32>
    %c0_32 = arith.constant 0 : index
    %c0_33 = arith.constant 0 : index
    %65 = vector.load %arg9[%c0_32, %c0_33] : memref<5x32xf32, #tpu.memory_space<vmem>>, vector<5x8xf32>
    tpu.vector_store %arg9[%c0_32, %c0_33], %64 {strides = array<i32>} : memref<5x32xf32, #tpu.memory_space<vmem>>, vector<5x8xf32>,
    %66 = vector.extract_strided_slice %42 {offsets = [0, 8], sizes = [5, 8], strides = [1, 1]} : vector<5x32xf32> to vector<5x8xf32>
    %67 = vector.extract_strided_slice %48 {offsets = [0, 8], sizes = [8, 8], strides = [1, 1]} : vector<8x32xf32> to vector<8x8xf32>
    %68 = vector.extract_strided_slice %49 {offsets = [0, 8], sizes = [8, 8], strides = [1, 1]} : vector<8x32xf32> to vector<8x8xf32>
    %cst_34 = arith.constant dense<0.000000e+00> : vector<5x8xf32>
    %69 = tpu.matmul %66, %67, %cst_34 {dimension_numbers = #tpu.dot_dimension_numbers<[1], [1], [0], [0], [0, 0, 1, 0], [], []>} : vector<5x8xf32>, vector<8x8xf32>, vector<5x8xf32> -> vector<5x8xf32>
    %cst_35 = arith.constant dense<0xFF800000> : vector<5xf32>
    %70 = vector.multi_reduction <maximumf>, %69, %cst_35 [1] : vector<5x8xf32> to vector<5xf32>
    %71 = vector.shape_cast %70 : vector<5xf32> to vector<5x1xf32>
    %72 = vector.broadcast %71 : vector<5x1xf32> to vector<5x8xf32>
    %73 = arith.subf %69, %72 : vector<5x8xf32>
    %74 = math.exp %73 : vector<5x8xf32>
    %cst_36 = arith.constant dense<0.000000e+00> : vector<5xf32>
    %75 = vector.multi_reduction <add>, %74, %cst_36 [1] : vector<5x8xf32> to vector<5xf32>
    %76 = vector.shape_cast %75 : vector<5xf32> to vector<5x1xf32>
    %77 = tpu.reciprocal %76 : vector<5x1xf32> -> vector<5x1xf32>
    %78 = vector.broadcast %77 : vector<5x1xf32> to vector<5x8xf32>
    %79 = arith.mulf %74, %78 : vector<5x8xf32>
    %cst_37 = arith.constant dense<0.000000e+00> : vector<5x8xf32>
    %80 = tpu.matmul %79, %68, %cst_37 {dimension_numbers = #tpu.dot_dimension_numbers<[1], [0], [0], [1], [0, 0, 1, 1], [], []>} : vector<5x8xf32>, vector<8x8xf32>, vector<5x8xf32> -> vector<5x8xf32>
    %c0_38 = arith.constant 0 : index
    %c8 = arith.constant 8 : index
    %81 = vector.load %arg9[%c0_38, %c8] : memref<5x32xf32, #tpu.memory_space<vmem>>, vector<5x8xf32>
    tpu.vector_store %arg9[%c0_38, %c8], %80 {strides = array<i32>} : memref<5x32xf32, #tpu.memory_space<vmem>>, vector<5x8xf32>,
    %82 = vector.extract_strided_slice %42 {offsets = [0, 16], sizes = [5, 8], strides = [1, 1]} : vector<5x32xf32> to vector<5x8xf32>
    %83 = vector.extract_strided_slice %48 {offsets = [0, 16], sizes = [8, 8], strides = [1, 1]} : vector<8x32xf32> to vector<8x8xf32>
    %84 = vector.extract_strided_slice %49 {offsets = [0, 16], sizes = [8, 8], strides = [1, 1]} : vector<8x32xf32> to vector<8x8xf32>
    %cst_39 = arith.constant dense<0.000000e+00> : vector<5x8xf32>
    %85 = tpu.matmul %82, %83, %cst_39 {dimension_numbers = #tpu.dot_dimension_numbers<[1], [1], [0], [0], [0, 0, 1, 0], [], []>} : vector<5x8xf32>, vector<8x8xf32>, vector<5x8xf32> -> vector<5x8xf32>
    %cst_40 = arith.constant dense<0xFF800000> : vector<5xf32>
    %86 = vector.multi_reduction <maximumf>, %85, %cst_40 [1] : vector<5x8xf32> to vector<5xf32>
    %87 = vector.shape_cast %86 : vector<5xf32> to vector<5x1xf32>
    %88 = vector.broadcast %87 : vector<5x1xf32> to vector<5x8xf32>
    %89 = arith.subf %85, %88 : vector<5x8xf32>
    %90 = math.exp %89 : vector<5x8xf32>
    %cst_41 = arith.constant dense<0.000000e+00> : vector<5xf32>
    %91 = vector.multi_reduction <add>, %90, %cst_41 [1] : vector<5x8xf32> to vector<5xf32>
    %92 = vector.shape_cast %91 : vector<5xf32> to vector<5x1xf32>
    %93 = tpu.reciprocal %92 : vector<5x1xf32> -> vector<5x1xf32>
    %94 = vector.broadcast %93 : vector<5x1xf32> to vector<5x8xf32>
    %95 = arith.mulf %90, %94 : vector<5x8xf32>
    %cst_42 = arith.constant dense<0.000000e+00> : vector<5x8xf32>
    %96 = tpu.matmul %95, %84, %cst_42 {dimension_numbers = #tpu.dot_dimension_numbers<[1], [0], [0], [1], [0, 0, 1, 1], [], []>} : vector<5x8xf32>, vector<8x8xf32>, vector<5x8xf32> -> vector<5x8xf32>
    %c0_43 = arith.constant 0 : index
    %c16 = arith.constant 16 : index
    %97 = vector.load %arg9[%c0_43, %c16] : memref<5x32xf32, #tpu.memory_space<vmem>>, vector<5x8xf32>
    tpu.vector_store %arg9[%c0_43, %c16], %96 {strides = array<i32>} : memref<5x32xf32, #tpu.memory_space<vmem>>, vector<5x8xf32>,
    %98 = vector.extract_strided_slice %42 {offsets = [0, 24], sizes = [5, 8], strides = [1, 1]} : vector<5x32xf32> to vector<5x8xf32>
    %99 = vector.extract_strided_slice %48 {offsets = [0, 24], sizes = [8, 8], strides = [1, 1]} : vector<8x32xf32> to vector<8x8xf32>
    %100 = vector.extract_strided_slice %49 {offsets = [0, 24], sizes = [8, 8], strides = [1, 1]} : vector<8x32xf32> to vector<8x8xf32>
    %cst_44 = arith.constant dense<0.000000e+00> : vector<5x8xf32>
    %101 = tpu.matmul %98, %99, %cst_44 {dimension_numbers = #tpu.dot_dimension_numbers<[1], [1], [0], [0], [0, 0, 1, 0], [], []>} : vector<5x8xf32>, vector<8x8xf32>, vector<5x8xf32> -> vector<5x8xf32>
    %cst_45 = arith.constant dense<0xFF800000> : vector<5xf32>
    %102 = vector.multi_reduction <maximumf>, %101, %cst_45 [1] : vector<5x8xf32> to vector<5xf32>
    %103 = vector.shape_cast %102 : vector<5xf32> to vector<5x1xf32>
    %104 = vector.broadcast %103 : vector<5x1xf32> to vector<5x8xf32>
    %105 = arith.subf %101, %104 : vector<5x8xf32>
    %106 = math.exp %105 : vector<5x8xf32>
    %cst_46 = arith.constant dense<0.000000e+00> : vector<5xf32>
    %107 = vector.multi_reduction <add>, %106, %cst_46 [1] : vector<5x8xf32> to vector<5xf32>
    %108 = vector.shape_cast %107 : vector<5xf32> to vector<5x1xf32>
    %109 = tpu.reciprocal %108 : vector<5x1xf32> -> vector<5x1xf32>
    %110 = vector.broadcast %109 : vector<5x1xf32> to vector<5x8xf32>
    %111 = arith.mulf %106, %110 : vector<5x8xf32>
    %cst_47 = arith.constant dense<0.000000e+00> : vector<5x8xf32>
    %112 = tpu.matmul %111, %100, %cst_47 {dimension_numbers = #tpu.dot_dimension_numbers<[1], [0], [0], [1], [0, 0, 1, 1], [], []>} : vector<5x8xf32>, vector<8x8xf32>, vector<5x8xf32> -> vector<5x8xf32>
    %c0_48 = arith.constant 0 : index
    %c24 = arith.constant 24 : index
    %113 = vector.load %arg9[%c0_48, %c24] : memref<5x32xf32, #tpu.memory_space<vmem>>, vector<5x8xf32>
    tpu.vector_store %arg9[%c0_48, %c24], %112 {strides = array<i32>} : memref<5x32xf32, #tpu.memory_space<vmem>>, vector<5x8xf32>,
    %c0_49 = arith.constant 0 : index
    %c0_50 = arith.constant 0 : index
    %114 = vector.load %arg9[%c0_49, %c0_50] : memref<5x32xf32, #tpu.memory_space<vmem>>, vector<5x32xf32>
    %c0_51 = arith.constant 0 : index
    %c0_52 = arith.constant 0 : index
    %c0_53 = arith.constant 0 : index
    %115 = vector.load %arg7[%c0_51, %c0_52, %c0_53] : memref<1x5x32xf32, #tpu.memory_space<vmem>>, vector<1x5x32xf32>
    %116 = vector.shape_cast %115 : vector<1x5x32xf32> to vector<5x32xf32>
    %117 = vector.shape_cast %114 : vector<5x32xf32> to vector<1x5x32xf32>
    tpu.vector_store %arg7[%c0_51, %c0_52, %c0_53], %117 {strides = array<i32>} : memref<1x5x32xf32, #tpu.memory_space<vmem>>, vector<1x5x32xf32>,
    return
  }
  func.func @transform_0(%arg0: i32, %arg1: memref<5xi32, #tpu.memory_space<smem>>) -> (i32, i32, i32) {
    %c0_i32 = arith.constant 0 : i32
    %c0_i32_0 = arith.constant 0 : i32
    %c0_i32_1 = arith.constant 0 : i32
    return %arg0, %c0_i32, %c0_i32_0 : i32, i32, i32
  }
  func.func @transform_1(%arg0: i32, %arg1: memref<5xi32, #tpu.memory_space<smem>>) -> (i32, i32) {
    %c0_i32 = arith.constant 0 : i32
    %c0_i32_0 = arith.constant 0 : i32
    %c0_i32_1 = arith.constant 0 : i32
    return %c0_i32, %c0_i32_0 : i32, i32
  }
  func.func @transform_2(%arg0: i32, %arg1: memref<5xi32, #tpu.memory_space<smem>>) -> (i32, i32) {
    %c0_i32 = arith.constant 0 : i32
    %c0_i32_0 = arith.constant 0 : i32
    %c0_i32_1 = arith.constant 0 : i32
    return %c0_i32, %c0_i32_0 : i32, i32
  }
  func.func @transform_3(%arg0: i32, %arg1: memref<5xi32, #tpu.memory_space<smem>>) -> (i32, i32) {
    %c0_i32 = arith.constant 0 : i32
    %c0_i32_0 = arith.constant 0 : i32
    %c0_i32_1 = arith.constant 0 : i32
    return %c0_i32, %c0_i32_0 : i32, i32
  }
  func.func @transform_4(%arg0: i32, %arg1: memref<5xi32, #tpu.memory_space<smem>>) -> (i32, i32) {
    %c0_i32 = arith.constant 0 : i32
    %c0_i32_0 = arith.constant 0 : i32
    %c0_i32_1 = arith.constant 0 : i32
    return %c0_i32, %c0_i32_0 : i32, i32
  }
  func.func @transform_5(%arg0: i32, %arg1: memref<5xi32, #tpu.memory_space<smem>>) -> (i32, i32, i32) {
    %c0_i32 = arith.constant 0 : i32
    %c0_i32_0 = arith.constant 0 : i32
    %c0_i32_1 = arith.constant 0 : i32
    return %arg0, %c0_i32, %c0_i32_0 : i32, i32, i32
  }
}

</mosaic_0001>

<llo_original>
// kernel: tpu_custom_call.1
$region0: #{tpu_custom_call.1}
  #allocation0 [shape = 'u32[]', space=smem, size = 0x4, offset = 0x4, fixed_abs, tag = 'smem constant byte address 0x4 - core index']
  #allocation1 [shape = 'u32[144,128]{1,0:T(1,128)}', space=vmem, size = 0x12000, scoped, tag = 'internal scratch']
  #allocation2 [shape = 'f32[5,32]{1,0:T(8,128)}', space=vmem, size = 0x1000, scoped, tag = 'scratch operand']
  #allocation3 [shape = 'f32[5,32]{1,0:T(8,128)}', space=vmem, size = 0x1000, scoped, tag = 'scratch operand']
  #allocation4 [shape = 's32[1]{0}', space=sflag, size = 0x4, scoped, tag = 'scoped memory for tpu_custom_call.1']
  #allocation5 [shape = 'u8[512]{0}', space=smem, size = 0x200, scoped, tag = 'prefetched SMEM operand 0']
  %s0 = inlined_call_operand.hbm [shape: s32[5], index: 0, kind: input, shape index: {}]
  %s1 = inlined_call_operand.hbm [shape: f32[2,8,32], index: 1, kind: input, shape index: {}]
  %s2 = inlined_call_operand.hbm [shape: f32[32,32], index: 2, kind: input, shape index: {}]
  %s3 = inlined_call_operand.vmem [shape: f32[1,32], index: 3, kind: input, shape index: {}]
  %s4 = inlined_call_operand.hbm [shape: f32[32,64], index: 4, kind: input, shape index: {}]
  %s5 = inlined_call_operand.vmem [shape: f32[1,64], index: 5, kind: input, shape index: {}]
  %s6 = inlined_call_operand.vmem [shape: f32[2,5,32], index: 6, kind: output, shape index: {}]
  %s7 = sld [smem:[#allocation0]]
  $region65: #{tpu_custom_call.1} parent=0
    _
  %s9 = ssub.s32 1, %s7
  %s10 = scalar_select 0, %s9, %s7
  %12 = dma.hbm_to_smem %s0, 16, [#allocation5], [#allocation4]
  %13 = dma.done [#allocation4], 16
  %14 = sfence
  $region1: #{tpu_custom_call.1} parent=0
    #allocation6 [shape = 'u8[8192]{0}', space=vmem, size = 0x2000, scoped, tag = 'input window, operand 1']
    #allocation7 [shape = 's32[2]{0}', space=sflag, size = 0x8, scoped, tag = 'scoped memory for tpu_custom_call.1']
    #allocation8 [shape = 'u8[16384]{0}', space=vmem, size = 0x4000, scoped, tag = 'input window, operand 2, single buffered']
    #allocation9 [shape = 's32[1]{0}', space=sflag, size = 0x4, scoped, tag = 'scoped memory for tpu_custom_call.1']
    #allocation10 [shape = 'u8[16384]{0}', space=vmem, size = 0x4000, scoped, tag = 'input window, operand 4, single buffered']
    %15 = vsyncpa [#allocation7], 0
    %s16 = scalar_lea.sflag [#allocation7], 1
    %17 = vsyncpa %s16, 0
    %18 = vsyncpa [#allocation9], 0
    loop: start=0, step=1, limit=4
    $region2: #{tpu_custom_call.1} parent=1 // loop_pre_header
      _
    $region3: #{tpu_custom_call.1} parent=1 // loop_header
      %s20 = sphi 0, %s24
      %p21 = scmp.ge.s32.totalorder %s20, 4
      %s30 = sphi 0, %s32
      %s33 = sphi 0, %s30
      %s34 = sphi 0, %s33
      %s50 = sphi 0, %s34
      %s54 = sphi 0, %s54
      %s56 = sphi 0, %s54
      %s57 = sphi 0, %s56
      %s71 = sphi 0, %s57
      %s75 = sphi 0, %s75
      %s77 = sphi 0, %s75
      %s78 = sphi 0, %s77
      %s92 = sphi 0, %s78
      %s96 = sphi 0, %s96
      %s98 = sphi 0, %s96
      %s99 = sphi 0, %s98
      %s113 = sphi 0, %s99
      %s117 = sphi 0, %s117
      %s119 = sphi 0, %s117
      %s120 = sphi 0, %s119
      %s134 = sphi 0, %s120
      %s140 = sphi 0, %s142
      %s143 = sphi 0, %s140
      %s144 = sphi 0, %s143
      %s160 = sphi 0, %s144
    $region4: #{tpu_custom_call.1} parent=1 // loop_header_branch
      %23 = sbr.rel (%p21) target = $region8
    $region5: #{tpu_custom_call.1} parent=1 // loop_body
      %s25 = ssub.s32 %s20, 1
      %s26 = ssub.s32 %s20, 2
      %s27 = sadd.s32 %s20, 1
      %s28 = ssub.s32 %s20, %s27
      %p29 = scmp.eq.s32.totalorder %s28, 0
      %s31 = sadd.s32 %s30, 1
      %s32 = scalar_select %p29, %s30, %s31
      %p35 = pneg %p29
      %p36 = scmp.eq.s32.totalorder %s20, 1
      %p37 = por %p35, %p36
      %p38 = scmp.ne.s32.totalorder %s30, %s33
      %p39 = scmp.eq.s32.totalorder %s20, 0
      %p40 = por %p38, %p39
      %p41 = scmp.ne.s32.totalorder %s30, %s33
      %p42 = scmp.eq.s32.totalorder %s25, 1
      %p43 = por %p41, %p42
      %p44 = scmp.ne.s32.totalorder %s33, %s34
      %p45 = scmp.eq.s32.totalorder %s25, 0
      %p46 = por %p44, %p45
      %p47 = scmp.ne.s32.totalorder %s33, %s34
      %p48 = scmp.eq.s32.totalorder %s26, 1
      %p49 = por %p47, %p48
      %p51 = scmp.ne.s32.totalorder %s34, %s50
      %p52 = scmp.eq.s32.totalorder %s26, 0
      %p53 = por %p51, %p52
      %s55 = sadd.s32 %s54, 1
      %p58 = scmp.eq.s32.totalorder %s20, 1
      %p59 = scmp.ne.s32.totalorder %s54, %s56
      %p60 = scmp.eq.s32.totalorder %s20, 0
      %p61 = por %p59, %p60
      %p62 = scmp.ne.s32.totalorder %s54, %s56
      %p63 = scmp.eq.s32.totalorder %s25, 1
      %p64 = por %p62, %p63
      %p65 = scmp.ne.s32.totalorder %s56, %s57
      %p66 = scmp.eq.s32.totalorder %s25, 0
      %p67 = por %p65, %p66
      %p68 = scmp.ne.s32.totalorder %s56, %s57
      %p69 = scmp.eq.s32.totalorder %s26, 1
      %p70 = por %p68, %p69
      %p72 = scmp.ne.s32.totalorder %s57, %s71
      %p73 = scmp.eq.s32.totalorder %s26, 0
      %p74 = por %p72, %p73
      %s76 = sadd.s32 %s75, 1
      %p79 = scmp.eq.s32.totalorder %s20, 1
      %p80 = scmp.ne.s32.totalorder %s75, %s77
      %p81 = scmp.eq.s32.totalorder %s20, 0
      %p82 = por %p80, %p81
      %p83 = scmp.ne.s32.totalorder %s75, %s77
      %p84 = scmp.eq.s32.totalorder %s25, 1
      %p85 = por %p83, %p84
      %p86 = scmp.ne.s32.totalorder %s77, %s78
      %p87 = scmp.eq.s32.totalorder %s25, 0
      %p88 = por %p86, %p87
      %p89 = scmp.ne.s32.totalorder %s77, %s78
      %p90 = scmp.eq.s32.totalorder %s26, 1
      %p91 = por %p89, %p90
      %p93 = scmp.ne.s32.totalorder %s78, %s92
      %p94 = scmp.eq.s32.totalorder %s26, 0
      %p95 = por %p93, %p94
      %s97 = sadd.s32 %s96, 1
      %p100 = scmp.eq.s32.totalorder %s20, 1
      %p101 = scmp.ne.s32.totalorder %s96, %s98
      %p102 = scmp.eq.s32.totalorder %s20, 0
      %p103 = por %p101, %p102
      %p104 = scmp.ne.s32.totalorder %s96, %s98
      %p105 = scmp.eq.s32.totalorder %s25, 1
      %p106 = por %p104, %p105
      %p107 = scmp.ne.s32.totalorder %s98, %s99
      %p108 = scmp.eq.s32.totalorder %s25, 0
      %p109 = por %p107, %p108
      %p110 = scmp.ne.s32.totalorder %s98, %s99
      %p111 = scmp.eq.s32.totalorder %s26, 1
      %p112 = por %p110, %p111
      %p114 = scmp.ne.s32.totalorder %s99, %s113
      %p115 = scmp.eq.s32.totalorder %s26, 0
      %p116 = por %p114, %p115
      %s118 = sadd.s32 %s117, 1
      %p121 = scmp.eq.s32.totalorder %s20, 1
      %p122 = scmp.ne.s32.totalorder %s117, %s119
      %p123 = scmp.eq.s32.totalorder %s20, 0
      %p124 = por %p122, %p123
      %p125 = scmp.ne.s32.totalorder %s117, %s119
      %p126 = scmp.eq.s32.totalorder %s25, 1
      %p127 = por %p125, %p126
      %p128 = scmp.ne.s32.totalorder %s119, %s120
      %p129 = scmp.eq.s32.totalorder %s25, 0
      %p130 = por %p128, %p129
      %p131 = scmp.ne.s32.totalorder %s119, %s120
      %p132 = scmp.eq.s32.totalorder %s26, 1
      %p133 = por %p131, %p132
      %p135 = scmp.ne.s32.totalorder %s120, %s134
      %p136 = scmp.eq.s32.totalorder %s26, 0
      %p137 = por %p135, %p136
      %s138 = ssub.s32 %s20, %s27
      %p139 = scmp.eq.s32.totalorder %s138, 0
      %s141 = sadd.s32 %s140, 1
      %s142 = scalar_select %p139, %s140, %s141
      %p145 = pneg %p139
      %p146 = scmp.eq.s32.totalorder %s20, 1
      %p147 = por %p145, %p146
      %p148 = scmp.ne.s32.totalorder %s140, %s143
      %p149 = scmp.eq.s32.totalorder %s20, 0
      %p150 = por %p148, %p149
      %p151 = scmp.ne.s32.totalorder %s140, %s143
      %p152 = scmp.eq.s32.totalorder %s25, 1
      %p153 = por %p151, %p152
      %p154 = scmp.ne.s32.totalorder %s143, %s144
      %p155 = scmp.eq.s32.totalorder %s25, 0
      %p156 = por %p154, %p155
      %p157 = scmp.ne.s32.totalorder %s143, %s144
      %p158 = scmp.eq.s32.totalorder %s26, 1
      %p159 = por %p157, %p158
      %p161 = scmp.ne.s32.totalorder %s144, %s160
      %p162 = scmp.eq.s32.totalorder %s26, 0
      %p163 = por %p161, %p162
      %p164 = scmp.le.s32.totalorder 1, %s20
      %p165 = scmp.lt.s32.totalorder %s20, 3
      %p166 = pnand %p164, %p165
      %p167 = pneg %p166
      // Predicated region
      $region9: #{tpu_custom_call.1} parent=5 // pred_check
        _
      $region10: #{tpu_custom_call.1} parent=5 // pred_check_branch
        %169 = sbr.rel (%p166) target = $region12
      $region11: #{tpu_custom_call.1} parent=5 // pred_region
        %s170 = ssub.s32 %s20, 1
        // Predicated region
        $region13: #{tpu_custom_call.1} parent=11 // pred_check
          %p171 = pneg %p67
        $region14: #{tpu_custom_call.1} parent=11 // pred_check_branch
          %173 = sbr.rel (%p171) target = $region16
        $region15: #{tpu_custom_call.1} parent=11 // pred_region
          %s175 = ssub.s32 512, 512
          %176 = vsyncadd [#allocation9], %s175
          %s177 = sshll.u32 [#allocation8], 4
          %s178 = int_to_ptr.vmem [resolvable:$true] %s177
          %183 = dma.hbm_to_vmem [thread:$0]  %s2, 512, %s178, [#allocation9], 128, 128, 8
        $region16: #{tpu_custom_call.1} parent=11 // pred_fallthru
          _
        // Predicated region
        $region17: #{tpu_custom_call.1} parent=11 // pred_check
          %p184 = pneg %p88
        $region18: #{tpu_custom_call.1} parent=11 // pred_check_branch
          %186 = sbr.rel (%p184) target = $region20
        $region19: #{tpu_custom_call.1} parent=11 // pred_region
          _
        $region20: #{tpu_custom_call.1} parent=11 // pred_fallthru
          _
        // Predicated region
        $region21: #{tpu_custom_call.1} parent=11 // pred_check
          %p187 = pneg %p109
        $region22: #{tpu_custom_call.1} parent=11 // pred_check_branch
          %189 = sbr.rel (%p187) target = $region24
        $region23: #{tpu_custom_call.1} parent=11 // pred_region
          %s191 = ssub.s32 512, 512
          %192 = vsyncadd [#allocation9], %s191
          %s193 = sshll.u32 [#allocation10], 4
          %s194 = int_to_ptr.vmem [resolvable:$true] %s193
          %199 = dma.hbm_to_vmem [thread:$0]  %s4, 512, %s194, [#allocation9], 128, 128, 8
        $region24: #{tpu_custom_call.1} parent=11 // pred_fallthru
          _
        // Predicated region
        $region25: #{tpu_custom_call.1} parent=11 // pred_check
          %p200 = pneg %p130
        $region26: #{tpu_custom_call.1} parent=11 // pred_check_branch
          %202 = sbr.rel (%p200) target = $region28
        $region27: #{tpu_custom_call.1} parent=11 // pred_region
          _
        $region28: #{tpu_custom_call.1} parent=11 // pred_fallthru
          _
      $region12: #{tpu_custom_call.1} parent=5 // pred_fallthru
        _
      %p203 = scmp.lt.s32.totalorder %s20, 2
      // Predicated region
      $region29: #{tpu_custom_call.1} parent=5 // pred_check
        %p204 = pneg %p203
      $region30: #{tpu_custom_call.1} parent=5 // pred_check_branch
        %206 = sbr.rel (%p204) target = $region32
      $region31: #{tpu_custom_call.1} parent=5 // pred_region
        // Predicated region
        $region33: #{tpu_custom_call.1} parent=31 // pred_check
          %p207 = pneg %p40
        $region34: #{tpu_custom_call.1} parent=31 // pred_check_branch
          %209 = sbr.rel (%p207) target = $region36
        $region35: #{tpu_custom_call.1} parent=31 // pred_region
          %s210 = sand.u32 %s30, 1
          %s211 = scalar_lea.sflag [#allocation7], %s210
          %s212 = sand.u32 %s30, 1
          %s213 = smul.addr %s212, 8
          %s214 = scalar_lea.vmem [#allocation6], %s213
          %s216 = ssub.s32 128, 128
          %217 = vsyncadd %s211, %s216
          %s218 = smul.addr %s20, 128
          %s219 = scalar_lea.hbm %s1, %s218
          %s221 = sshll.u32 %s214, 4
          %s222 = int_to_ptr.vmem [resolvable:$true] %s221
          %224 = dma.hbm_to_vmem [thread:$0]  %s219, 128, %s222, %s211
        $region36: #{tpu_custom_call.1} parent=31 // pred_fallthru
          _
      $region32: #{tpu_custom_call.1} parent=5 // pred_fallthru
        _
      %p225 = scmp.le.s32.totalorder 1, %s20
      %p226 = scmp.lt.s32.totalorder %s20, 3
      %p227 = pnand %p225, %p226
      %p228 = pneg %p227
      // Predicated region
      $region37: #{tpu_custom_call.1} parent=5 // pred_check
        _
      $region38: #{tpu_custom_call.1} parent=5 // pred_check_branch
        %230 = sbr.rel (%p227) target = $region40
      $region39: #{tpu_custom_call.1} parent=5 // pred_region
        %s231 = ssub.s32 %s20, 1
        %s232 = sand.u32 %s33, 1
        %s233 = scalar_lea.sflag [#allocation7], %s232
        %s234 = sand.u32 %s33, 1
        %s235 = smul.addr %s234, 8
        %s236 = scalar_lea.vmem [#allocation6], %s235
        // Predicated region
        $region41: #{tpu_custom_call.1} parent=39 // pred_check
          %p237 = pneg %p46
        $region42: #{tpu_custom_call.1} parent=39 // pred_check_branch
          %239 = sbr.rel (%p237) target = $region44
        $region43: #{tpu_custom_call.1} parent=39 // pred_region
          %240 = dma.done %s233, 128
        $region44: #{tpu_custom_call.1} parent=39 // pred_fallthru
          _
        // Predicated region
        $region45: #{tpu_custom_call.1} parent=39 // pred_check
          %p241 = pneg %p67
        $region46: #{tpu_custom_call.1} parent=39 // pred_check_branch
          %243 = sbr.rel (%p241) target = $region48
        $region47: #{tpu_custom_call.1} parent=39 // pred_region
          %244 = dma.done [#allocation9], 512
        $region48: #{tpu_custom_call.1} parent=39 // pred_fallthru
          _
        // Predicated region
        $region49: #{tpu_custom_call.1} parent=39 // pred_check
          %p245 = pneg %p109
        $region50: #{tpu_custom_call.1} parent=39 // pred_check_branch
          %247 = sbr.rel (%p245) target = $region52
        $region51: #{tpu_custom_call.1} parent=39 // pred_region
          %248 = dma.done [#allocation9], 512
        $region52: #{tpu_custom_call.1} parent=39 // pred_fallthru
          _
        %s249 = sand.u32 %s33, 1
        %s250 = scalar_lea.sflag [#allocation7], %s249
        %s251 = sand.u32 %s33, 1
        %s252 = smul.addr %s251, 8
        %s253 = scalar_lea.vmem [#allocation6], %s252
        %p254 = pneg %p46
        %p255 = pneg %p43
        %p256 = pneg %p67
        %p257 = pneg %p64
        %p258 = pneg %p88
        %p259 = pneg %p85
        %p260 = pneg %p109
        %p261 = pneg %p106
        %p262 = pneg %p130
        %p263 = pneg %p127
        %p264 = pneg %p156
        %p265 = pneg %p153
        %p266 = scmp.lt.s32.totalorder %s25, 1
        %s267 = scalar_select %p266, %s25, 1
        %s268 = smul.addr %s267, 8
        %s269 = scalar_lea.vmem %s6, %s268
        %p270 = scmp.lt.s32.totalorder %s25, 1
        %s271 = scalar_select %p270, %s25, 1
        %s272 = smul.addr %s271, 8
        %s273 = scalar_lea.vmem %s6, %s272
        %s274 = sld [smem:[#allocation5]]
        %s275 = scalar_lea.vmem %s236, %s274 [#allocation6]
        %v276 = vld [vmem:[%s275] sm:$0x1]
        %vm277 = vcmask 253952
        %278 = vst.msk [vmem:[#allocation2] sm:$0x1] %vm277, %v276
        %s279 = sld [smem:[#allocation5 + $0x1]]
        %s280 = scalar_lea.vmem %s236, %s279 [#allocation6]
        %v281 = vld [vmem:[%s280] sm:$0x1]
        %282 = vst.msk [vmem:[#allocation2 + $0x1] sm:$0x1] %vm277, %v281
        %s283 = sld [smem:[#allocation5 + $0x2]]
        %s284 = scalar_lea.vmem %s236, %s283 [#allocation6]
        %v285 = vld [vmem:[%s284] sm:$0x1]
        %286 = vst.msk [vmem:[#allocation2 + $0x2] sm:$0x1] %vm277, %v285
        %s287 = sld [smem:[#allocation5 + $0x3]]
        %s288 = scalar_lea.vmem %s236, %s287 [#allocation6]
        %v289 = vld [vmem:[%s288] sm:$0x1]
        %290 = vst.msk [vmem:[#allocation2 + $0x3] sm:$0x1] %vm277, %v289
        %s291 = sld [smem:[#allocation5 + $0x4]]
        %s292 = scalar_lea.vmem %s236, %s291 [#allocation6]
        %v293 = vld [vmem:[%s292] sm:$0x1]
        %294 = vst.msk [vmem:[#allocation2 + $0x4] sm:$0x1] %vm277, %v293
        %v295 = vld [vmem:[%s236] sm:$0xff]
        %v296 = vld [vmem:[#allocation2] sm:$0x1f]
        %v297 = vld [vmem:[#allocation8] sm:$0xff]
        %v298 = vld [vmem:[#allocation8 + $0x8] sm:$0xff]
        %v299 = vld [vmem:[#allocation8 + $0x10] sm:$0xff]
        %v300 = vld [vmem:[#allocation8 + $0x18] sm:$0xff]
        %v301 = vld [vmem:[%s3] sm:$0x1]
        %v303 = vlaneseq
        %v304 = vshrl.u32 %v303, 7
        %v305 = vsub.s32 0, %v304
        %v306 = vrot.slane %v301, %v305
        %vm308 = vcmask 261120
        %v310 = vsel %vm308, %v296, 0
        %312 = vmatprep.subr.mxu0 0.0
        %313 = vmatpush1.msra.mxu0 %v297
        %314 = vmatprep.subr.mxu0 0.0
        %315 = vmatpush1.msra.mxu0 %v298
        %316 = vmatprep.subr.mxu0 0.0
        %317 = vmatpush1.msra.mxu0 %v299
        %318 = vmatprep.subr.mxu0 0.0
        %319 = vmatpush1.msra.mxu0 %v300
        %320 = vmatprep.subr.mxu0 0.0
        %321 = vmatpush1.msra.mxu0 0.0
        %322 = vmatprep.subr.mxu0 0.0
        %323 = vmatpush1.msra.mxu0 0.0
        %324 = vmatprep.subr.mxu0 0.0
        %325 = vmatpush1.msra.mxu0 0.0
        %326 = vmatprep.subr.mxu0 0.0
        %327 = vmatpush1.msra.mxu0 0.0
        %328 = vmatprep.subr.mxu0 0.0
        %329 = vmatpush1.msra.mxu0 0.0
        %330 = vmatprep.subr.mxu0 0.0
        %331 = vmatpush1.msra.mxu0 0.0
        %332 = vmatprep.subr.mxu0 0.0
        %333 = vmatpush1.msra.mxu0 0.0
        %334 = vmatprep.subr.mxu0 0.0
        %335 = vmatpush1.msra.mxu0 0.0
        %336 = vmatprep.subr.mxu0 0.0
        %337 = vmatpush1.msra.mxu0 0.0
        %338 = vmatprep.subr.mxu0 0.0
        %339 = vmatpush1.msra.mxu0 0.0
        %340 = vmatprep.subr.mxu0 0.0
        %341 = vmatpush1.msra.mxu0 0.0
        %342 = vmatprep.subr.mxu0 0.0
        %343 = vmatpush1.msra.mxu0 0.0
        %344 = vmatprep.subr.mxu0 0.0
        %345 = vmatpush1.msra.mxu0 0.0
        %346 = vmatprep.subr.mxu0 0.0
        %347 = vmatpush1.msra.mxu0 0.0
        %348 = vmatprep.subr.mxu0 0.0
        %349 = vmatpush1.msra.mxu0 0.0
        %350 = vmatprep.subr.mxu0 0.0
        %351 = vmatpush1.msra.mxu0 0.0
        %352 = vmatprep.subr.mxu0 0.0
        %353 = vmatpush1.msra.mxu0 0.0
        %354 = vmatprep.subr.mxu0 0.0
        %355 = vmatpush1.msra.mxu0 0.0
        %356 = vmatprep.subr.mxu0 0.0
        %357 = vmatpush1.msra.mxu0 0.0
        %358 = vmatprep.subr.mxu0 0.0
        %359 = vmatpush1.msra.mxu0 0.0
        %360 = vmatprep.subr.mxu0 0.0
        %361 = vmatpush1.msra.mxu0 0.0
        %362 = vmatprep.subr.mxu0 0.0
        %363 = vmatpush1.msra.mxu0 0.0
        %364 = vmatprep.subr.mxu0 0.0
        %365 = vmatpush1.msra.mxu0 0.0
        %366 = vmatprep.subr.mxu0 0.0
        %367 = vmatpush1.msra.mxu0 0.0
        %368 = vmatprep.subr.mxu0 0.0
        %369 = vmatpush1.msra.mxu0 0.0
        %370 = vmatprep.subr.mxu0 0.0
        %371 = vmatpush1.msra.mxu0 0.0
        %372 = vmatprep.subr.mxu0 0.0
        %373 = vmatpush1.msra.mxu0 0.0
        %374 = vmatprep.subr.mxu0 0.0
        %375 = vmatpush1.msra.mxu0 0.0
        %376 = vmatprep.mubr.f32.mxu0 0.0
        %377 = vmatmul.mubr.f32.gmra.mrb[0].mxu0 %v310
        %v378 = vpop.f32.mrb[0].mxu0
        %v379 = vadd.f32 %v306, %v378
        %v380 = vpop.f32.mrb[0].mxu0
        %381 = vdwg.mxu0
        %v382 = vld [vmem:[#allocation10] sm:$0xff]
        %v383 = vld [vmem:[#allocation10 + $0x8] sm:$0xff]
        %v384 = vld [vmem:[#allocation10 + $0x10] sm:$0xff]
        %v385 = vld [vmem:[#allocation10 + $0x18] sm:$0xff]
        %v386 = vld [vmem:[%s5] sm:$0x1]
        %v388 = vlaneseq
        %v389 = vshrl.u32 %v388, 7
        %v390 = vsub.s32 0, %v389
        %v391 = vrot.slane %v386, %v390
        %v394 = vsel %vm308, %v295, 0
        %396 = vmatprep.subr.mxu0 0.0
        %397 = vmatpush1.msra.mxu0 %v382
        %398 = vmatprep.subr.mxu0 0.0
        %399 = vmatpush1.msra.mxu0 %v383
        %400 = vmatprep.subr.mxu0 0.0
        %401 = vmatpush1.msra.mxu0 %v384
        %402 = vmatprep.subr.mxu0 0.0
        %403 = vmatpush1.msra.mxu0 %v385
        %404 = vmatprep.subr.mxu0 0.0
        %405 = vmatpush1.msra.mxu0 0.0
        %406 = vmatprep.subr.mxu0 0.0
        %407 = vmatpush1.msra.mxu0 0.0
        %408 = vmatprep.subr.mxu0 0.0
        %409 = vmatpush1.msra.mxu0 0.0
        %410 = vmatprep.subr.mxu0 0.0
        %411 = vmatpush1.msra.mxu0 0.0
        %412 = vmatprep.subr.mxu0 0.0
        %413 = vmatpush1.msra.mxu0 0.0
        %414 = vmatprep.subr.mxu0 0.0
        %415 = vmatpush1.msra.mxu0 0.0
        %416 = vmatprep.subr.mxu0 0.0
        %417 = vmatpush1.msra.mxu0 0.0
        %418 = vmatprep.subr.mxu0 0.0
        %419 = vmatpush1.msra.mxu0 0.0
        %420 = vmatprep.subr.mxu0 0.0
        %421 = vmatpush1.msra.mxu0 0.0
        %422 = vmatprep.subr.mxu0 0.0
        %423 = vmatpush1.msra.mxu0 0.0
        %424 = vmatprep.subr.mxu0 0.0
        %425 = vmatpush1.msra.mxu0 0.0
        %426 = vmatprep.subr.mxu0 0.0
        %427 = vmatpush1.msra.mxu0 0.0
        %428 = vmatprep.subr.mxu0 0.0
        %429 = vmatpush1.msra.mxu0 0.0
        %430 = vmatprep.subr.mxu0 0.0
        %431 = vmatpush1.msra.mxu0 0.0
        %432 = vmatprep.subr.mxu0 0.0
        %433 = vmatpush1.msra.mxu0 0.0
        %434 = vmatprep.subr.mxu0 0.0
        %435 = vmatpush1.msra.mxu0 0.0
        %436 = vmatprep.subr.mxu0 0.0
        %437 = vmatpush1.msra.mxu0 0.0
        %438 = vmatprep.subr.mxu0 0.0
        %439 = vmatpush1.msra.mxu0 0.0
        %440 = vmatprep.subr.mxu0 0.0
        %441 = vmatpush1.msra.mxu0 0.0
        %442 = vmatprep.subr.mxu0 0.0
        %443 = vmatpush1.msra.mxu0 0.0
        %444 = vmatprep.subr.mxu0 0.0
        %445 = vmatpush1.msra.mxu0 0.0
        %446 = vmatprep.subr.mxu0 0.0
        %447 = vmatpush1.msra.mxu0 0.0
        %448 = vmatprep.subr.mxu0 0.0
        %449 = vmatpush1.msra.mxu0 0.0
        %450 = vmatprep.subr.mxu0 0.0
        %451 = vmatpush1.msra.mxu0 0.0
        %452 = vmatprep.subr.mxu0 0.0
        %453 = vmatpush1.msra.mxu0 0.0
        %454 = vmatprep.subr.mxu0 0.0
        %455 = vmatpush1.msra.mxu0 0.0
        %456 = vmatprep.subr.mxu0 0.0
        %457 = vmatpush1.msra.mxu0 0.0
        %458 = vmatprep.subr.mxu0 0.0
        %459 = vmatpush1.msra.mxu0 0.0
        %460 = vmatprep.mubr.f32.mxu0 0.0
        %461 = vmatmul.mubr.f32.gmra.mrb[0].mxu0 %v394
        %v462 = vpop.f32.mrb[0].mxu0
        %v463 = vadd.f32 %v391, %v462
        %v464 = vpop.f32.mrb[0].mxu0
        %465 = vdwg.mxu0
        %vm466 = vcmask 64512
        %v468 = vsel %vm466, %v379, 0
        %v471 = vsel %vm466, %v463, 0
        %473 = vmatprep.subr.mxu0 0.0
        %474 = vmatpush1.xpose.msra.mxu0 %v471
        %475 = vmatprep.subr.mxu0 0.0
        %476 = vmatpush1.xpose.msra.mxu0 0.0
        %477 = vmatprep.subr.mxu0 0.0
        %478 = vmatpush1.xpose.msra.mxu0 0.0
        %479 = vmatprep.subr.mxu0 0.0
        %480 = vmatpush1.xpose.msra.mxu0 0.0
        %481 = vmatprep.subr.mxu0 0.0
        %482 = vmatpush1.xpose.msra.mxu0 0.0
        %483 = vmatprep.subr.mxu0 0.0
        %484 = vmatpush1.xpose.msra.mxu0 0.0
        %485 = vmatprep.subr.mxu0 0.0
        %486 = vmatpush1.xpose.msra.mxu0 0.0
        %487 = vmatprep.subr.mxu0 0.0
        %488 = vmatpush1.xpose.msra.mxu0 0.0
        %489 = vmatprep.subr.mxu0 0.0
        %490 = vmatpush1.xpose.msra.mxu0 0.0
        %491 = vmatprep.subr.mxu0 0.0
        %492 = vmatpush1.xpose.msra.mxu0 0.0
        %493 = vmatprep.subr.mxu0 0.0
        %494 = vmatpush1.xpose.msra.mxu0 0.0
        %495 = vmatprep.subr.mxu0 0.0
        %496 = vmatpush1.xpose.msra.mxu0 0.0
        %497 = vmatprep.subr.mxu0 0.0
        %498 = vmatpush1.xpose.msra.mxu0 0.0
        %499 = vmatprep.subr.mxu0 0.0
        %500 = vmatpush1.xpose.msra.mxu0 0.0
        %501 = vmatprep.subr.mxu0 0.0
        %502 = vmatpush1.xpose.msra.mxu0 0.0
        %503 = vmatprep.subr.mxu0 0.0
        %504 = vmatpush1.xpose.msra.mxu0 0.0
        %505 = vmatprep.subr.mxu0 0.0
        %506 = vmatpush1.xpose.msra.mxu0 0.0
        %507 = vmatprep.subr.mxu0 0.0
        %508 = vmatpush1.xpose.msra.mxu0 0.0
        %509 = vmatprep.subr.mxu0 0.0
        %510 = vmatpush1.xpose.msra.mxu0 0.0
        %511 = vmatprep.subr.mxu0 0.0
        %512 = vmatpush1.xpose.msra.mxu0 0.0
        %513 = vmatprep.subr.mxu0 0.0
        %514 = vmatpush1.xpose.msra.mxu0 0.0
        %515 = vmatprep.subr.mxu0 0.0
        %516 = vmatpush1.xpose.msra.mxu0 0.0
        %517 = vmatprep.subr.mxu0 0.0
        %518 = vmatpush1.xpose.msra.mxu0 0.0
        %519 = vmatprep.subr.mxu0 0.0
        %520 = vmatpush1.xpose.msra.mxu0 0.0
        %521 = vmatprep.subr.mxu0 0.0
        %522 = vmatpush1.xpose.msra.mxu0 0.0
        %523 = vmatprep.subr.mxu0 0.0
        %524 = vmatpush1.xpose.msra.mxu0 0.0
        %525 = vmatprep.subr.mxu0 0.0
        %526 = vmatpush1.xpose.msra.mxu0 0.0
        %527 = vmatprep.subr.mxu0 0.0
        %528 = vmatpush1.xpose.msra.mxu0 0.0
        %529 = vmatprep.subr.mxu0 0.0
        %530 = vmatpush1.xpose.msra.mxu0 0.0
        %531 = vmatprep.subr.mxu0 0.0
        %532 = vmatpush1.xpose.msra.mxu0 0.0
        %533 = vmatprep.subr.mxu0 0.0
        %534 = vmatpush1.xpose.msra.mxu0 0.0
        %535 = vmatprep.subr.mxu0 0.0
        %536 = vmatpush1.xpose.msra.mxu0 0.0
        %537 = vmatprep.mubr.f32.mxu0 0.0
        %538 = vmatmul.mubr.f32.gmra.mrb[0].mxu0 %v468
        %v539 = vpop.f32.mrb[0].mxu0
        %v540 = vadd.f32 0.0, %v539
        %v541 = vpop.f32.mrb[0].mxu0
        %542 = vdwg.mxu0
        %vm543 = vcmask 61440
        %v544 = vsel %vm543, %v540, -inf
        %545 = vmax.xlane.f32.xlu0 %v544
        %v546 = vpop.xlane.xlu0 %545
        %v547 = vsub.f32 %v540, %v546
        %v548 = vmul.f32 %v547, 1.442695
        %v549 = vpow.pop %v548
        %v550 = vsel %vm543, %v549, 0.0
        %551 = vadd.xlane.f32.xlu0 %v550
        %v552 = vpop.xlane.xlu0 %551
        %v553 = vrcp.pop %v552
        %v554 = vmul.f32 %v549, %v553
        %555 = vrot.lane.b32.xlu0 %v463, 96
        %v556 = vpop.permute.xlu0 %555
        %v559 = vsel %vm466, %v554, 0
        %561 = vmatprep.subr.mxu0 0.0
        %562 = vmatpush1.msra.mxu0 %v556
        %563 = vmatprep.subr.mxu0 0.0
        %564 = vmatpush1.msra.mxu0 0.0
        %565 = vmatprep.subr.mxu0 0.0
        %566 = vmatpush1.msra.mxu0 0.0
        %567 = vmatprep.subr.mxu0 0.0
        %568 = vmatpush1.msra.mxu0 0.0
        %569 = vmatprep.subr.mxu0 0.0
        %570 = vmatpush1.msra.mxu0 0.0
        %571 = vmatprep.subr.mxu0 0.0
        %572 = vmatpush1.msra.mxu0 0.0
        %573 = vmatprep.subr.mxu0 0.0
        %574 = vmatpush1.msra.mxu0 0.0
        %575 = vmatprep.subr.mxu0 0.0
        %576 = vmatpush1.msra.mxu0 0.0
        %577 = vmatprep.subr.mxu0 0.0
        %578 = vmatpush1.msra.mxu0 0.0
        %579 = vmatprep.subr.mxu0 0.0
        %580 = vmatpush1.msra.mxu0 0.0
        %581 = vmatprep.subr.mxu0 0.0
        %582 = vmatpush1.msra.mxu0 0.0
        %583 = vmatprep.subr.mxu0 0.0
        %584 = vmatpush1.msra.mxu0 0.0
        %585 = vmatprep.subr.mxu0 0.0
        %586 = vmatpush1.msra.mxu0 0.0
        %587 = vmatprep.subr.mxu0 0.0
        %588 = vmatpush1.msra.mxu0 0.0
        %589 = vmatprep.subr.mxu0 0.0
        %590 = vmatpush1.msra.mxu0 0.0
        %591 = vmatprep.subr.mxu0 0.0
        %592 = vmatpush1.msra.mxu0 0.0
        %593 = vmatprep.subr.mxu0 0.0
        %594 = vmatpush1.msra.mxu0 0.0
        %595 = vmatprep.subr.mxu0 0.0
        %596 = vmatpush1.msra.mxu0 0.0
        %597 = vmatprep.subr.mxu0 0.0
        %598 = vmatpush1.msra.mxu0 0.0
        %599 = vmatprep.subr.mxu0 0.0
        %600 = vmatpush1.msra.mxu0 0.0
        %601 = vmatprep.subr.mxu0 0.0
        %602 = vmatpush1.msra.mxu0 0.0
        %603 = vmatprep.subr.mxu0 0.0
        %604 = vmatpush1.msra.mxu0 0.0
        %605 = vmatprep.subr.mxu0 0.0
        %606 = vmatpush1.msra.mxu0 0.0
        %607 = vmatprep.subr.mxu0 0.0
        %608 = vmatpush1.msra.mxu0 0.0
        %609 = vmatprep.subr.mxu0 0.0
        %610 = vmatpush1.msra.mxu0 0.0
        %611 = vmatprep.subr.mxu0 0.0
        %612 = vmatpush1.msra.mxu0 0.0
        %613 = vmatprep.subr.mxu0 0.0
        %614 = vmatpush1.msra.mxu0 0.0
        %615 = vmatprep.subr.mxu0 0.0
        %616 = vmatpush1.msra.mxu0 0.0
        %617 = vmatprep.subr.mxu0 0.0
        %618 = vmatpush1.msra.mxu0 0.0
        %619 = vmatprep.subr.mxu0 0.0
        %620 = vmatpush1.msra.mxu0 0.0
        %621 = vmatprep.subr.mxu0 0.0
        %622 = vmatpush1.msra.mxu0 0.0
        %623 = vmatprep.subr.mxu0 0.0
        %624 = vmatpush1.msra.mxu0 0.0
        %625 = vmatprep.mubr.f32.mxu0 0.0
        %626 = vmatmul.mubr.f32.gmra.mrb[0].mxu0 %v559
        %v627 = vpop.f32.mrb[0].mxu0
        %v628 = vadd.f32 0.0, %v627
        %v629 = vpop.f32.mrb[0].mxu0
        %630 = vdwg.mxu0
        %631 = vst.msk [vmem:[#allocation3] sm:$0x1f] %vm543, %v628
        %632 = vrot.lane.b32.xlu0 %v379, 120
        %v633 = vpop.permute.xlu0 %632
        %634 = vrot.lane.b32.xlu0 %v463, 120
        %v635 = vpop.permute.xlu0 %634
        %v636 = vsel %vm466, %v633, 0
        %v638 = vsel %vm466, %v635, 0
        %640 = vmatprep.subr.mxu0 0.0
        %641 = vmatpush1.xpose.msra.mxu0 %v638
        %642 = vmatprep.subr.mxu0 0.0
        %643 = vmatpush1.xpose.msra.mxu0 0.0
        %644 = vmatprep.subr.mxu0 0.0
        %645 = vmatpush1.xpose.msra.mxu0 0.0
        %646 = vmatprep.subr.mxu0 0.0
        %647 = vmatpush1.xpose.msra.mxu0 0.0
        %648 = vmatprep.subr.mxu0 0.0
        %649 = vmatpush1.xpose.msra.mxu0 0.0
        %650 = vmatprep.subr.mxu0 0.0
        %651 = vmatpush1.xpose.msra.mxu0 0.0
        %652 = vmatprep.subr.mxu0 0.0
        %653 = vmatpush1.xpose.msra.mxu0 0.0
        %654 = vmatprep.subr.mxu0 0.0
        %655 = vmatpush1.xpose.msra.mxu0 0.0
        %656 = vmatprep.subr.mxu0 0.0
        %657 = vmatpush1.xpose.msra.mxu0 0.0
        %658 = vmatprep.subr.mxu0 0.0
        %659 = vmatpush1.xpose.msra.mxu0 0.0
        %660 = vmatprep.subr.mxu0 0.0
        %661 = vmatpush1.xpose.msra.mxu0 0.0
        %662 = vmatprep.subr.mxu0 0.0
        %663 = vmatpush1.xpose.msra.mxu0 0.0
        %664 = vmatprep.subr.mxu0 0.0
        %665 = vmatpush1.xpose.msra.mxu0 0.0
        %666 = vmatprep.subr.mxu0 0.0
        %667 = vmatpush1.xpose.msra.mxu0 0.0
        %668 = vmatprep.subr.mxu0 0.0
        %669 = vmatpush1.xpose.msra.mxu0 0.0
        %670 = vmatprep.subr.mxu0 0.0
        %671 = vmatpush1.xpose.msra.mxu0 0.0
        %672 = vmatprep.subr.mxu0 0.0
        %673 = vmatpush1.xpose.msra.mxu0 0.0
        %674 = vmatprep.subr.mxu0 0.0
        %675 = vmatpush1.xpose.msra.mxu0 0.0
        %676 = vmatprep.subr.mxu0 0.0
        %677 = vmatpush1.xpose.msra.mxu0 0.0
        %678 = vmatprep.subr.mxu0 0.0
        %679 = vmatpush1.xpose.msra.mxu0 0.0
        %680 = vmatprep.subr.mxu0 0.0
        %681 = vmatpush1.xpose.msra.mxu0 0.0
        %682 = vmatprep.subr.mxu0 0.0
        %683 = vmatpush1.xpose.msra.mxu0 0.0
        %684 = vmatprep.subr.mxu0 0.0
        %685 = vmatpush1.xpose.msra.mxu0 0.0
        %686 = vmatprep.subr.mxu0 0.0
        %687 = vmatpush1.xpose.msra.mxu0 0.0
        %688 = vmatprep.subr.mxu0 0.0
        %689 = vmatpush1.xpose.msra.mxu0 0.0
        %690 = vmatprep.subr.mxu0 0.0
        %691 = vmatpush1.xpose.msra.mxu0 0.0
        %692 = vmatprep.subr.mxu0 0.0
        %693 = vmatpush1.xpose.msra.mxu0 0.0
        %694 = vmatprep.subr.mxu0 0.0
        %695 = vmatpush1.xpose.msra.mxu0 0.0
        %696 = vmatprep.subr.mxu0 0.0
        %697 = vmatpush1.xpose.msra.mxu0 0.0
        %698 = vmatprep.subr.mxu0 0.0
        %699 = vmatpush1.xpose.msra.mxu0 0.0
        %700 = vmatprep.subr.mxu0 0.0
        %701 = vmatpush1.xpose.msra.mxu0 0.0
        %702 = vmatprep.subr.mxu0 0.0
        %703 = vmatpush1.xpose.msra.mxu0 0.0
        %704 = vmatprep.mubr.f32.mxu0 0.0
        %705 = vmatmul.mubr.f32.gmra.mrb[0].mxu0 %v636
        %v706 = vpop.f32.mrb[0].mxu0
        %v707 = vadd.f32 0.0, %v706
        %v708 = vpop.f32.mrb[0].mxu0
        %709 = vdwg.mxu0
        %v710 = vsel %vm543, %v707, -inf
        %711 = vmax.xlane.f32.xlu0 %v710
        %v712 = vpop.xlane.xlu0 %711
        %v713 = vsub.f32 %v707, %v712
        %v714 = vmul.f32 %v713, 1.442695
        %v715 = vpow.pop %v714
        %v716 = vsel %vm543, %v715, 0.0
        %717 = vadd.xlane.f32.xlu0 %v716
        %v718 = vpop.xlane.xlu0 %717
        %v719 = vrcp.pop %v718
        %v720 = vmul.f32 %v715, %v719
        %721 = vrot.lane.b32.xlu0 %v463, 88
        %v722 = vpop.permute.xlu0 %721
        %v725 = vsel %vm466, %v720, 0
        %727 = vmatprep.subr.mxu0 0.0
        %728 = vmatpush1.msra.mxu0 %v722
        %729 = vmatprep.subr.mxu0 0.0
        %730 = vmatpush1.msra.mxu0 0.0
        %731 = vmatprep.subr.mxu0 0.0
        %732 = vmatpush1.msra.mxu0 0.0
        %733 = vmatprep.subr.mxu0 0.0
        %734 = vmatpush1.msra.mxu0 0.0
        %735 = vmatprep.subr.mxu0 0.0
        %736 = vmatpush1.msra.mxu0 0.0
        %737 = vmatprep.subr.mxu0 0.0
        %738 = vmatpush1.msra.mxu0 0.0
        %739 = vmatprep.subr.mxu0 0.0
        %740 = vmatpush1.msra.mxu0 0.0
        %741 = vmatprep.subr.mxu0 0.0
        %742 = vmatpush1.msra.mxu0 0.0
        %743 = vmatprep.subr.mxu0 0.0
        %744 = vmatpush1.msra.mxu0 0.0
        %745 = vmatprep.subr.mxu0 0.0
        %746 = vmatpush1.msra.mxu0 0.0
        %747 = vmatprep.subr.mxu0 0.0
        %748 = vmatpush1.msra.mxu0 0.0
        %749 = vmatprep.subr.mxu0 0.0
        %750 = vmatpush1.msra.mxu0 0.0
        %751 = vmatprep.subr.mxu0 0.0
        %752 = vmatpush1.msra.mxu0 0.0
        %753 = vmatprep.subr.mxu0 0.0
        %754 = vmatpush1.msra.mxu0 0.0
        %755 = vmatprep.subr.mxu0 0.0
        %756 = vmatpush1.msra.mxu0 0.0
        %757 = vmatprep.subr.mxu0 0.0
        %758 = vmatpush1.msra.mxu0 0.0
        %759 = vmatprep.subr.mxu0 0.0
        %760 = vmatpush1.msra.mxu0 0.0
        %761 = vmatprep.subr.mxu0 0.0
        %762 = vmatpush1.msra.mxu0 0.0
        %763 = vmatprep.subr.mxu0 0.0
        %764 = vmatpush1.msra.mxu0 0.0
        %765 = vmatprep.subr.mxu0 0.0
        %766 = vmatpush1.msra.mxu0 0.0
        %767 = vmatprep.subr.mxu0 0.0
        %768 = vmatpush1.msra.mxu0 0.0
        %769 = vmatprep.subr.mxu0 0.0
        %770 = vmatpush1.msra.mxu0 0.0
        %771 = vmatprep.subr.mxu0 0.0
        %772 = vmatpush1.msra.mxu0 0.0
        %773 = vmatprep.subr.mxu0 0.0
        %774 = vmatpush1.msra.mxu0 0.0
        %775 = vmatprep.subr.mxu0 0.0
        %776 = vmatpush1.msra.mxu0 0.0
        %777 = vmatprep.subr.mxu0 0.0
        %778 = vmatpush1.msra.mxu0 0.0
        %779 = vmatprep.subr.mxu0 0.0
        %780 = vmatpush1.msra.mxu0 0.0
        %781 = vmatprep.subr.mxu0 0.0
        %782 = vmatpush1.msra.mxu0 0.0
        %783 = vmatprep.subr.mxu0 0.0
        %784 = vmatpush1.msra.mxu0 0.0
        %785 = vmatprep.subr.mxu0 0.0
        %786 = vmatpush1.msra.mxu0 0.0
        %787 = vmatprep.subr.mxu0 0.0
        %788 = vmatpush1.msra.mxu0 0.0
        %789 = vmatprep.subr.mxu0 0.0
        %790 = vmatpush1.msra.mxu0 0.0
        %791 = vmatprep.mubr.f32.mxu0 0.0
        %792 = vmatmul.mubr.f32.gmra.mrb[0].mxu0 %v725
        %v793 = vpop.f32.mrb[0].mxu0
        %v794 = vadd.f32 0.0, %v793
        %v795 = vpop.f32.mrb[0].mxu0
        %796 = vdwg.mxu0
        %798 = vrot.lane.b32.xlu0 %v794, 8
        %v799 = vpop.permute.xlu0 %798
        %vm801 = vcmask 127040
        %802 = vst.msk [vmem:[#allocation3] sm:$0x1f] %vm801, %v799
        %803 = vrot.lane.b32.xlu0 %v379, 112
        %v804 = vpop.permute.xlu0 %803
        %805 = vrot.lane.b32.xlu0 %v463, 112
        %v806 = vpop.permute.xlu0 %805
        %v807 = vsel %vm466, %v804, 0
        %v809 = vsel %vm466, %v806, 0
        %811 = vmatprep.subr.mxu0 0.0
        %812 = vmatpush1.xpose.msra.mxu0 %v809
        %813 = vmatprep.subr.mxu0 0.0
        %814 = vmatpush1.xpose.msra.mxu0 0.0
        %815 = vmatprep.subr.mxu0 0.0
        %816 = vmatpush1.xpose.msra.mxu0 0.0
        %817 = vmatprep.subr.mxu0 0.0
        %818 = vmatpush1.xpose.msra.mxu0 0.0
        %819 = vmatprep.subr.mxu0 0.0
        %820 = vmatpush1.xpose.msra.mxu0 0.0
        %821 = vmatprep.subr.mxu0 0.0
        %822 = vmatpush1.xpose.msra.mxu0 0.0
        %823 = vmatprep.subr.mxu0 0.0
        %824 = vmatpush1.xpose.msra.mxu0 0.0
        %825 = vmatprep.subr.mxu0 0.0
        %826 = vmatpush1.xpose.msra.mxu0 0.0
        %827 = vmatprep.subr.mxu0 0.0
        %828 = vmatpush1.xpose.msra.mxu0 0.0
        %829 = vmatprep.subr.mxu0 0.0
        %830 = vmatpush1.xpose.msra.mxu0 0.0
        %831 = vmatprep.subr.mxu0 0.0
        %832 = vmatpush1.xpose.msra.mxu0 0.0
        %833 = vmatprep.subr.mxu0 0.0
        %834 = vmatpush1.xpose.msra.mxu0 0.0
        %835 = vmatprep.subr.mxu0 0.0
        %836 = vmatpush1.xpose.msra.mxu0 0.0
        %837 = vmatprep.subr.mxu0 0.0
        %838 = vmatpush1.xpose.msra.mxu0 0.0
        %839 = vmatprep.subr.mxu0 0.0
        %840 = vmatpush1.xpose.msra.mxu0 0.0
        %841 = vmatprep.subr.mxu0 0.0
        %842 = vmatpush1.xpose.msra.mxu0 0.0
        %843 = vmatprep.subr.mxu0 0.0
        %844 = vmatpush1.xpose.msra.mxu0 0.0
        %845 = vmatprep.subr.mxu0 0.0
        %846 = vmatpush1.xpose.msra.mxu0 0.0
        %847 = vmatprep.subr.mxu0 0.0
        %848 = vmatpush1.xpose.msra.mxu0 0.0
        %849 = vmatprep.subr.mxu0 0.0
        %850 = vmatpush1.xpose.msra.mxu0 0.0
        %851 = vmatprep.subr.mxu0 0.0
        %852 = vmatpush1.xpose.msra.mxu0 0.0
        %853 = vmatprep.subr.mxu0 0.0
        %854 = vmatpush1.xpose.msra.mxu0 0.0
        %855 = vmatprep.subr.mxu0 0.0
        %856 = vmatpush1.xpose.msra.mxu0 0.0
        %857 = vmatprep.subr.mxu0 0.0
        %858 = vmatpush1.xpose.msra.mxu0 0.0
        %859 = vmatprep.subr.mxu0 0.0
        %860 = vmatpush1.xpose.msra.mxu0 0.0
        %861 = vmatprep.subr.mxu0 0.0
        %862 = vmatpush1.xpose.msra.mxu0 0.0
        %863 = vmatprep.subr.mxu0 0.0
        %864 = vmatpush1.xpose.msra.mxu0 0.0
        %865 = vmatprep.subr.mxu0 0.0
        %866 = vmatpush1.xpose.msra.mxu0 0.0
        %867 = vmatprep.subr.mxu0 0.0
        %868 = vmatpush1.xpose.msra.mxu0 0.0
        %869 = vmatprep.subr.mxu0 0.0
        %870 = vmatpush1.xpose.msra.mxu0 0.0
        %871 = vmatprep.subr.mxu0 0.0
        %872 = vmatpush1.xpose.msra.mxu0 0.0
        %873 = vmatprep.subr.mxu0 0.0
        %874 = vmatpush1.xpose.msra.mxu0 0.0
        %875 = vmatprep.mubr.f32.mxu0 0.0
        %876 = vmatmul.mubr.f32.gmra.mrb[0].mxu0 %v807
        %v877 = vpop.f32.mrb[0].mxu0
        %v878 = vadd.f32 0.0, %v877
        %v879 = vpop.f32.mrb[0].mxu0
        %880 = vdwg.mxu0
        %v881 = vsel %vm543, %v878, -inf
        %882 = vmax.xlane.f32.xlu0 %v881
        %v883 = vpop.xlane.xlu0 %882
        %v884 = vsub.f32 %v878, %v883
        %v885 = vmul.f32 %v884, 1.442695
        %v886 = vpow.pop %v885
        %v887 = vsel %vm543, %v886, 0.0
        %888 = vadd.xlane.f32.xlu0 %v887
        %v889 = vpop.xlane.xlu0 %888
        %v890 = vrcp.pop %v889
        %v891 = vmul.f32 %v886, %v890
        %892 = vrot.lane.b32.xlu0 %v463, 80
        %v893 = vpop.permute.xlu0 %892
        %v896 = vsel %vm466, %v891, 0
        %898 = vmatprep.subr.mxu0 0.0
        %899 = vmatpush1.msra.mxu0 %v893
        %900 = vmatprep.subr.mxu0 0.0
        %901 = vmatpush1.msra.mxu0 0.0
        %902 = vmatprep.subr.mxu0 0.0
        %903 = vmatpush1.msra.mxu0 0.0
        %904 = vmatprep.subr.mxu0 0.0
        %905 = vmatpush1.msra.mxu0 0.0
        %906 = vmatprep.subr.mxu0 0.0
        %907 = vmatpush1.msra.mxu0 0.0
        %908 = vmatprep.subr.mxu0 0.0
        %909 = vmatpush1.msra.mxu0 0.0
        %910 = vmatprep.subr.mxu0 0.0
        %911 = vmatpush1.msra.mxu0 0.0
        %912 = vmatprep.subr.mxu0 0.0
        %913 = vmatpush1.msra.mxu0 0.0
        %914 = vmatprep.subr.mxu0 0.0
        %915 = vmatpush1.msra.mxu0 0.0
        %916 = vmatprep.subr.mxu0 0.0
        %917 = vmatpush1.msra.mxu0 0.0
        %918 = vmatprep.subr.mxu0 0.0
        %919 = vmatpush1.msra.mxu0 0.0
        %920 = vmatprep.subr.mxu0 0.0
        %921 = vmatpush1.msra.mxu0 0.0
        %922 = vmatprep.subr.mxu0 0.0
        %923 = vmatpush1.msra.mxu0 0.0
        %924 = vmatprep.subr.mxu0 0.0
        %925 = vmatpush1.msra.mxu0 0.0
        %926 = vmatprep.subr.mxu0 0.0
        %927 = vmatpush1.msra.mxu0 0.0
        %928 = vmatprep.subr.mxu0 0.0
        %929 = vmatpush1.msra.mxu0 0.0
        %930 = vmatprep.subr.mxu0 0.0
        %931 = vmatpush1.msra.mxu0 0.0
        %932 = vmatprep.subr.mxu0 0.0
        %933 = vmatpush1.msra.mxu0 0.0
        %934 = vmatprep.subr.mxu0 0.0
        %935 = vmatpush1.msra.mxu0 0.0
        %936 = vmatprep.subr.mxu0 0.0
        %937 = vmatpush1.msra.mxu0 0.0
        %938 = vmatprep.subr.mxu0 0.0
        %939 = vmatpush1.msra.mxu0 0.0
        %940 = vmatprep.subr.mxu0 0.0
        %941 = vmatpush1.msra.mxu0 0.0
        %942 = vmatprep.subr.mxu0 0.0
        %943 = vmatpush1.msra.mxu0 0.0
        %944 = vmatprep.subr.mxu0 0.0
        %945 = vmatpush1.msra.mxu0 0.0
        %946 = vmatprep.subr.mxu0 0.0
        %947 = vmatpush1.msra.mxu0 0.0
        %948 = vmatprep.subr.mxu0 0.0
        %949 = vmatpush1.msra.mxu0 0.0
        %950 = vmatprep.subr.mxu0 0.0
        %951 = vmatpush1.msra.mxu0 0.0
        %952 = vmatprep.subr.mxu0 0.0
        %953 = vmatpush1.msra.mxu0 0.0
        %954 = vmatprep.subr.mxu0 0.0
        %955 = vmatpush1.msra.mxu0 0.0
        %956 = vmatprep.subr.mxu0 0.0
        %957 = vmatpush1.msra.mxu0 0.0
        %958 = vmatprep.subr.mxu0 0.0
        %959 = vmatpush1.msra.mxu0 0.0
        %960 = vmatprep.subr.mxu0 0.0
        %961 = vmatpush1.msra.mxu0 0.0
        %962 = vmatprep.mubr.f32.mxu0 0.0
        %963 = vmatmul.mubr.f32.gmra.mrb[0].mxu0 %v896
        %v964 = vpop.f32.mrb[0].mxu0
        %v965 = vadd.f32 0.0, %v964
        %v966 = vpop.f32.mrb[0].mxu0
        %967 = vdwg.mxu0
        %969 = vrot.lane.b32.xlu0 %v965, 16
        %v970 = vpop.permute.xlu0 %969
        %vm972 = vcmask 192640
        %973 = vst.msk [vmem:[#allocation3] sm:$0x1f] %vm972, %v970
        %974 = vrot.lane.b32.xlu0 %v379, 104
        %v975 = vpop.permute.xlu0 %974
        %976 = vrot.lane.b32.xlu0 %v463, 104
        %v977 = vpop.permute.xlu0 %976
        %v978 = vsel %vm466, %v975, 0
        %v980 = vsel %vm466, %v977, 0
        %982 = vmatprep.subr.mxu0 0.0
        %983 = vmatpush1.xpose.msra.mxu0 %v980
        %984 = vmatprep.subr.mxu0 0.0
        %985 = vmatpush1.xpose.msra.mxu0 0.0
        %986 = vmatprep.subr.mxu0 0.0
        %987 = vmatpush1.xpose.msra.mxu0 0.0
        %988 = vmatprep.subr.mxu0 0.0
        %989 = vmatpush1.xpose.msra.mxu0 0.0
        %990 = vmatprep.subr.mxu0 0.0
        %991 = vmatpush1.xpose.msra.mxu0 0.0
        %992 = vmatprep.subr.mxu0 0.0
        %993 = vmatpush1.xpose.msra.mxu0 0.0
        %994 = vmatprep.subr.mxu0 0.0
        %995 = vmatpush1.xpose.msra.mxu0 0.0
        %996 = vmatprep.subr.mxu0 0.0
        %997 = vmatpush1.xpose.msra.mxu0 0.0
        %998 = vmatprep.subr.mxu0 0.0
        %999 = vmatpush1.xpose.msra.mxu0 0.0
        %1000 = vmatprep.subr.mxu0 0.0
        %1001 = vmatpush1.xpose.msra.mxu0 0.0
        %1002 = vmatprep.subr.mxu0 0.0
        %1003 = vmatpush1.xpose.msra.mxu0 0.0
        %1004 = vmatprep.subr.mxu0 0.0
        %1005 = vmatpush1.xpose.msra.mxu0 0.0
        %1006 = vmatprep.subr.mxu0 0.0
        %1007 = vmatpush1.xpose.msra.mxu0 0.0
        %1008 = vmatprep.subr.mxu0 0.0
        %1009 = vmatpush1.xpose.msra.mxu0 0.0
        %1010 = vmatprep.subr.mxu0 0.0
        %1011 = vmatpush1.xpose.msra.mxu0 0.0
        %1012 = vmatprep.subr.mxu0 0.0
        %1013 = vmatpush1.xpose.msra.mxu0 0.0
        %1014 = vmatprep.subr.mxu0 0.0
        %1015 = vmatpush1.xpose.msra.mxu0 0.0
        %1016 = vmatprep.subr.mxu0 0.0
        %1017 = vmatpush1.xpose.msra.mxu0 0.0
        %1018 = vmatprep.subr.mxu0 0.0
        %1019 = vmatpush1.xpose.msra.mxu0 0.0
        %1020 = vmatprep.subr.mxu0 0.0
        %1021 = vmatpush1.xpose.msra.mxu0 0.0
        %1022 = vmatprep.subr.mxu0 0.0
        %1023 = vmatpush1.xpose.msra.mxu0 0.0
        %1024 = vmatprep.subr.mxu0 0.0
        %1025 = vmatpush1.xpose.msra.mxu0 0.0
        %1026 = vmatprep.subr.mxu0 0.0
        %1027 = vmatpush1.xpose.msra.mxu0 0.0
        %1028 = vmatprep.subr.mxu0 0.0
        %1029 = vmatpush1.xpose.msra.mxu0 0.0
        %1030 = vmatprep.subr.mxu0 0.0
        %1031 = vmatpush1.xpose.msra.mxu0 0.0
        %1032 = vmatprep.subr.mxu0 0.0
        %1033 = vmatpush1.xpose.msra.mxu0 0.0
        %1034 = vmatprep.subr.mxu0 0.0
        %1035 = vmatpush1.xpose.msra.mxu0 0.0
        %1036 = vmatprep.subr.mxu0 0.0
        %1037 = vmatpush1.xpose.msra.mxu0 0.0
        %1038 = vmatprep.subr.mxu0 0.0
        %1039 = vmatpush1.xpose.msra.mxu0 0.0
        %1040 = vmatprep.subr.mxu0 0.0
        %1041 = vmatpush1.xpose.msra.mxu0 0.0
        %1042 = vmatprep.subr.mxu0 0.0
        %1043 = vmatpush1.xpose.msra.mxu0 0.0
        %1044 = vmatprep.subr.mxu0 0.0
        %1045 = vmatpush1.xpose.msra.mxu0 0.0
        %1046 = vmatprep.mubr.f32.mxu0 0.0
        %1047 = vmatmul.mubr.f32.gmra.mrb[0].mxu0 %v978
        %v1048 = vpop.f32.mrb[0].mxu0
        %v1049 = vadd.f32 0.0, %v1048
        %v1050 = vpop.f32.mrb[0].mxu0
        %1051 = vdwg.mxu0
        %v1052 = vsel %vm543, %v1049, -inf
        %1053 = vmax.xlane.f32.xlu0 %v1052
        %v1054 = vpop.xlane.xlu0 %1053
        %v1055 = vsub.f32 %v1049, %v1054
        %v1056 = vmul.f32 %v1055, 1.442695
        %v1057 = vpow.pop %v1056
        %v1058 = vsel %vm543, %v1057, 0.0
        %1059 = vadd.xlane.f32.xlu0 %v1058
        %v1060 = vpop.xlane.xlu0 %1059
        %v1061 = vrcp.pop %v1060
        %v1062 = vmul.f32 %v1057, %v1061
        %1063 = vrot.lane.b32.xlu0 %v463, 72
        %v1064 = vpop.permute.xlu0 %1063
        %v1067 = vsel %vm466, %v1062, 0
        %1069 = vmatprep.subr.mxu0 0.0
        %1070 = vmatpush1.msra.mxu0 %v1064
        %1071 = vmatprep.subr.mxu0 0.0
        %1072 = vmatpush1.msra.mxu0 0.0
        %1073 = vmatprep.subr.mxu0 0.0
        %1074 = vmatpush1.msra.mxu0 0.0
        %1075 = vmatprep.subr.mxu0 0.0
        %1076 = vmatpush1.msra.mxu0 0.0
        %1077 = vmatprep.subr.mxu0 0.0
        %1078 = vmatpush1.msra.mxu0 0.0
        %1079 = vmatprep.subr.mxu0 0.0
        %1080 = vmatpush1.msra.mxu0 0.0
        %1081 = vmatprep.subr.mxu0 0.0
        %1082 = vmatpush1.msra.mxu0 0.0
        %1083 = vmatprep.subr.mxu0 0.0
        %1084 = vmatpush1.msra.mxu0 0.0
        %1085 = vmatprep.subr.mxu0 0.0
        %1086 = vmatpush1.msra.mxu0 0.0
        %1087 = vmatprep.subr.mxu0 0.0
        %1088 = vmatpush1.msra.mxu0 0.0
        %1089 = vmatprep.subr.mxu0 0.0
        %1090 = vmatpush1.msra.mxu0 0.0
        %1091 = vmatprep.subr.mxu0 0.0
        %1092 = vmatpush1.msra.mxu0 0.0
        %1093 = vmatprep.subr.mxu0 0.0
        %1094 = vmatpush1.msra.mxu0 0.0
        %1095 = vmatprep.subr.mxu0 0.0
        %1096 = vmatpush1.msra.mxu0 0.0
        %1097 = vmatprep.subr.mxu0 0.0
        %1098 = vmatpush1.msra.mxu0 0.0
        %1099 = vmatprep.subr.mxu0 0.0
        %1100 = vmatpush1.msra.mxu0 0.0
        %1101 = vmatprep.subr.mxu0 0.0
        %1102 = vmatpush1.msra.mxu0 0.0
        %1103 = vmatprep.subr.mxu0 0.0
        %1104 = vmatpush1.msra.mxu0 0.0
        %1105 = vmatprep.subr.mxu0 0.0
        %1106 = vmatpush1.msra.mxu0 0.0
        %1107 = vmatprep.subr.mxu0 0.0
        %1108 = vmatpush1.msra.mxu0 0.0
        %1109 = vmatprep.subr.mxu0 0.0
        %1110 = vmatpush1.msra.mxu0 0.0
        %1111 = vmatprep.subr.mxu0 0.0
        %1112 = vmatpush1.msra.mxu0 0.0
        %1113 = vmatprep.subr.mxu0 0.0
        %1114 = vmatpush1.msra.mxu0 0.0
        %1115 = vmatprep.subr.mxu0 0.0
        %1116 = vmatpush1.msra.mxu0 0.0
        %1117 = vmatprep.subr.mxu0 0.0
        %1118 = vmatpush1.msra.mxu0 0.0
        %1119 = vmatprep.subr.mxu0 0.0
        %1120 = vmatpush1.msra.mxu0 0.0
        %1121 = vmatprep.subr.mxu0 0.0
        %1122 = vmatpush1.msra.mxu0 0.0
        %1123 = vmatprep.subr.mxu0 0.0
        %1124 = vmatpush1.msra.mxu0 0.0
        %1125 = vmatprep.subr.mxu0 0.0
        %1126 = vmatpush1.msra.mxu0 0.0
        %1127 = vmatprep.subr.mxu0 0.0
        %1128 = vmatpush1.msra.mxu0 0.0
        %1129 = vmatprep.subr.mxu0 0.0
        %1130 = vmatpush1.msra.mxu0 0.0
        %1131 = vmatprep.subr.mxu0 0.0
        %1132 = vmatpush1.msra.mxu0 0.0
        %1133 = vmatprep.mubr.f32.mxu0 0.0
        %1134 = vmatmul.mubr.f32.gmra.mrb[0].mxu0 %v1067
        %v1135 = vpop.f32.mrb[0].mxu0
        %v1136 = vadd.f32 0.0, %v1135
        %v1137 = vpop.f32.mrb[0].mxu0
        %1138 = vdwg.mxu0
        %1140 = vrot.lane.b32.xlu0 %v1136, 24
        %v1141 = vpop.permute.xlu0 %1140
        %vm1143 = vcmask 258240
        %1144 = vst.msk [vmem:[#allocation3] sm:$0x1f] %vm1143, %v1141
        %v1145 = vld [vmem:[#allocation3] sm:$0x1f]
        %vm1146 = vcmask 258048
        %1147 = vst.msk [vmem:[%s273] sm:$0x1f] %vm1146, %v1145
        %p1148 = scmp.lt.s32.totalorder %s25, 1
        %s1149 = scalar_select %p1148, %s25, 1
        %s1150 = smul.addr %s1149, 8
        %s1151 = scalar_lea.vmem %s6, %s1150
        // Predicated region
        $region53: #{tpu_custom_call.1} parent=39 // pred_check
          %p1152 = pneg %p153
        $region54: #{tpu_custom_call.1} parent=39 // pred_check_branch
          %1154 = sbr.rel (%p1152) target = $region56
        $region55: #{tpu_custom_call.1} parent=39 // pred_region
          _
        $region56: #{tpu_custom_call.1} parent=39 // pred_fallthru
          _
      $region40: #{tpu_custom_call.1} parent=5 // pred_fallthru
        _
      %p1155 = scmp.le.s32.totalorder 2, %s20
      // Predicated region
      $region57: #{tpu_custom_call.1} parent=5 // pred_check
        %p1156 = pneg %p1155
      $region58: #{tpu_custom_call.1} parent=5 // pred_check_branch
        %1158 = sbr.rel (%p1156) target = $region60
      $region59: #{tpu_custom_call.1} parent=5 // pred_region
        %s1159 = ssub.s32 %s20, 2
        // Predicated region
        $region61: #{tpu_custom_call.1} parent=59 // pred_check
          %p1160 = pneg %p159
        $region62: #{tpu_custom_call.1} parent=59 // pred_check_branch
          %1162 = sbr.rel (%p1160) target = $region64
        $region63: #{tpu_custom_call.1} parent=59 // pred_region
          %p1163 = scmp.lt.s32.totalorder %s26, 1
          %s1164 = scalar_select %p1163, %s26, 1
          %s1165 = smul.addr %s1164, 8
          %s1166 = scalar_lea.vmem %s6, %s1165
        $region64: #{tpu_custom_call.1} parent=59 // pred_fallthru
          _
      $region60: #{tpu_custom_call.1} parent=5 // pred_fallthru
        _
    $region6: #{tpu_custom_call.1} parent=1 // loop_footer
      %s24 = sadd.s32 1, %s20
    $region7: #{tpu_custom_call.1} parent=1 // loop_footer_branch
      %19 = sbr.rel target = $region3
    $region8: #{tpu_custom_call.1} parent=1 // loop_exit
      _
    %1167 = vsyncpa [#allocation7], 1
    %s1168 = scalar_lea.sflag [#allocation7], 1
    %1169 = vsyncpa %s1168, 1
    %1170 = vsyncpa [#allocation9], 1

</llo_original>
